<compile_context>
chip_gen: v6e
topology: v6e:2x2x1
jax: 0.10.0
libtpu: 0.0.40
codegen_flags: <defaults>
</compile_context>

<pallas_src>
import functools

import jax
import jax.numpy as jnp
from jax.experimental import pallas as pl
from jax.experimental.pallas import tpu as pltpu

_LN_EPS = 1e-5                 # PyTorch nn.LayerNorm default
_INV_SQRT2 = 0.7071067811865476
_VMEM_LIMIT = 48 * 1024 * 1024  # above v5e/v6e/v7x defaults, below v7x physical 64 MiB


def _layernorm_f32(v, w, b):
    v = v.astype(jnp.float32)
    mu = jnp.mean(v, axis=-1, keepdims=True)
    var = jnp.mean((v - mu) ** 2, axis=-1, keepdims=True)
    return (v - mu) * jax.lax.rsqrt(var + _LN_EPS) * w + b


def _gelu_exact(v):
    # nn.GELU default (erf form), not the tanh approximation; keep in f32.
    return 0.5 * v * (1.0 + jax.lax.erf(v * _INV_SQRT2))


# ---------------------------------------------------------------------------
# Kernel 1: LayerNorm1 + QKV projection (q pre-scaled by 1/sqrt(head_dim)).
# ---------------------------------------------------------------------------
def _qkv_kernel(scale, x_ref, ln1w_ref, ln1b_ref, wq_ref, wk_ref, wv_ref,
                q_ref, k_ref, v_ref):
    xn = _layernorm_f32(x_ref[...], ln1w_ref[...], ln1b_ref[...])   # (TN, D) f32
    xb = xn.astype(wq_ref.dtype)                                    # bf16 matmul operand
    q = jnp.dot(xb, wq_ref[...], preferred_element_type=jnp.float32)
    k = jnp.dot(xb, wk_ref[...], preferred_element_type=jnp.float32)
    v = jnp.dot(xb, wv_ref[...], preferred_element_type=jnp.float32)
    q_ref[...] = (q * scale).astype(q_ref.dtype)   # fold softmax scale into q (cheap: TN*D)
    k_ref[...] = k.astype(k_ref.dtype)
    v_ref[...] = v.astype(v_ref.dtype)


# ---------------------------------------------------------------------------
# Kernel 2: attention core, all heads batched via a leading-batch dot_general.
#   q block: (H, TQ, hd)   k/v blocks: (H, N, hd)   -> o block: (H, TQ, hd)
# ---------------------------------------------------------------------------
def _attn_kernel(q_ref, k_ref, v_ref, o_ref):
    qh = q_ref[...]                              # bf16, already scaled
    kh = k_ref[...]
    vh = v_ref[...]
    # scores: (H, TQ, N), f32 accumulation on the MXU
    s = jax.lax.dot_general(qh, kh, (((2,), (2,)), ((0,), (0,))),
                            preferred_element_type=jnp.float32)
    s = s - jnp.max(s, axis=-1, keepdims=True)   # stable softmax in f32
    p = jnp.exp(s)
    p = p * pl.reciprocal(jnp.sum(p, axis=-1, keepdims=True), approx=True)  # EUP divide
    o = jax.lax.dot_general(p.astype(vh.dtype), vh, (((2,), (1,)), ((0,), (0,))),
                            preferred_element_type=jnp.float32)             # (H, TQ, hd)
    o_ref[...] = o.astype(o_ref.dtype)


# ---------------------------------------------------------------------------
# Kernel 3: fused out-projection + gamma_1 residual + LayerNorm2 + MLP + gamma_2 residual.
# ---------------------------------------------------------------------------
def _proj_mlp_kernel(x_ref, attn_ref, wo_ref, g1_ref, ln2w_ref, ln2b_ref,
                     w1_ref, b1_ref, w2_ref, b2_ref, g2_ref, out_ref):
    # ONE full-depth (TN, D) @ (D, D) out-projection (replaces per-head accumulation).
    proj = jnp.dot(attn_ref[...], wo_ref[...], preferred_element_type=jnp.float32)
    x1 = x_ref[...] + g1_ref[...] * proj                         # f32 residual
    xn2 = _layernorm_f32(x1, ln2w_ref[...], ln2b_ref[...])
    h1 = jnp.dot(xn2.astype(w1_ref.dtype), w1_ref[...],
                 preferred_element_type=jnp.float32) + b1_ref[...]
    h1 = _gelu_exact(h1)
    h2 = jnp.dot(h1.astype(w2_ref.dtype), w2_ref[...],
                 preferred_element_type=jnp.float32) + b2_ref[...]
    out_ref[...] = (x1 + g2_ref[...] * h2).astype(out_ref.dtype)


def _full_spec(shape):
    # Whole-array block, constant index (fetched once; index never changes across grid).
    return pl.BlockSpec(shape, lambda *args, n=len(shape): (0,) * n)


def layer_scale_init_block(x, params, num_heads):
    B, N, D = x.shape
    H = num_heads
    hd = D // H
    Dh = params["w1"].shape[1]
    scale = 1.0 / float(hd) ** 0.5
    cdtype = params["wq"].dtype                 # bf16 compute dtype for matmul operands

    tn = min(128, N)                            # token tile (multiple of 8, or full N)
    grid_n = pl.cdiv(N, tn)
    cp = pltpu.CompilerParams(dimension_semantics=("parallel", "parallel"),
                              vmem_limit_bytes=_VMEM_LIMIT)

    tok_spec_f32 = pl.BlockSpec((pl.Squeezed(), tn, D), lambda b, i: (b, i, 0))
    tok_spec_out = pl.BlockSpec((pl.Squeezed(), tn, D), lambda b, i: (b, i, 0))

    # ---- kernel 1: LN1 + QKV ------------------------------------------------
    q, k, v = pl.pallas_call(
        functools.partial(_qkv_kernel, scale),
        out_shape=(jax.ShapeDtypeStruct((B, N, D), cdtype),) * 3,
        grid=(B, grid_n),
        in_specs=[
            tok_spec_f32,                               # x tile
            _full_spec((1, D)), _full_spec((1, D)),     # ln1 weight / bias
            _full_spec((D, D)), _full_spec((D, D)), _full_spec((D, D)),   # Wq, Wk, Wv
        ],
        out_specs=[pl.BlockSpec((pl.Squeezed(), tn, D), lambda b, i: (b, i, 0))
                   for _ in range(3)],
        compiler_params=cp,
    )(x, params["ln1_w"], params["ln1_b"], params["wq"], params["wk"], params["wv"])

    # Head-split layout change is wrapper-side layout plumbing (no compute hoisted).
    def _to_heads(t):
        return t.reshape(B, N, H, hd).transpose(0, 2, 1, 3)     # (B, H, N, hd)
    qh, kh, vh = map(_to_heads, (q, k, v))

    # ---- kernel 2: attention core over (batch, query-tile) ------------------
    o = pl.pallas_call(
        _attn_kernel,
        out_shape=jax.ShapeDtypeStruct((B, H, N, hd), cdtype),
        grid=(B, grid_n),
        in_specs=[
            pl.BlockSpec((pl.Squeezed(), H, tn, hd), lambda b, i: (b, 0, i, 0)),  # q tile
            pl.BlockSpec((pl.Squeezed(), H, N, hd), lambda b, i: (b, 0, 0, 0)),   # full K
            pl.BlockSpec((pl.Squeezed(), H, N, hd), lambda b, i: (b, 0, 0, 0)),   # full V
        ],
        out_specs=pl.BlockSpec((pl.Squeezed(), H, tn, hd), lambda b, i: (b, 0, i, 0)),
        compiler_params=cp,
    )(qh, kh, vh)
    o = o.transpose(0, 2, 1, 3).reshape(B, N, D)                # back to lane-dense (B, N, D)

    # ---- kernel 3: out-proj + residual + MLP branch --------------------------
    out = pl.pallas_call(
        _proj_mlp_kernel,
        out_shape=jax.ShapeDtypeStruct((B, N, D), x.dtype),
        grid=(B, grid_n),
        in_specs=[
            tok_spec_f32,                                   # x (residual)
            pl.BlockSpec((pl.Squeezed(), tn, D), lambda b, i: (b, i, 0)),  # attn output
            _full_spec((D, D)),                             # Wo
            _full_spec((1, D)),                             # gamma_1
            _full_spec((1, D)), _full_spec((1, D)),         # ln2 weight / bias
            _full_spec((D, Dh)), _full_spec((1, Dh)),       # fc1 w / b
            _full_spec((Dh, D)), _full_spec((1, D)),        # fc2 w / b
            _full_spec((1, D)),                             # gamma_2
        ],
        out_specs=tok_spec_out,
        compiler_params=cp,
    )(x, o, params["wo"], params["g1"], params["ln2_w"], params["ln2_b"],
      params["w1"], params["b1"], params["w2"], params["b2"], params["g2"])
    return out


def init_params(key, dim, mlp_ratio=4.0, init_values=1e-4):
    hidden = int(dim * mlp_ratio)
    ks = jax.random.split(key, 10)
    s = 0.05
    f32, bf16 = jnp.float32, jnp.bfloat16

    def w(k, shape):                 # matmul weights live in bf16 (MXU-native)
        return (s * jax.random.normal(k, shape, f32)).astype(bf16)

    return dict(
        ln1_w=1.0 + s * jax.random.normal(ks[0], (1, dim), f32),
        ln1_b=s * jax.random.normal(ks[1], (1, dim), f32),
        wq=w(ks[2], (dim, dim)), wk=w(ks[3], (dim, dim)), wv=w(ks[4], (dim, dim)),
        wo=w(ks[5], (dim, dim)),                               # MHA out_proj, bias=False
        ln2_w=1.0 + s * jax.random.normal(ks[6], (1, dim), f32),
        ln2_b=s * jax.random.normal(ks[7], (1, dim), f32),
        w1=w(ks[8], (dim, hidden)), b1=jnp.zeros((1, hidden), f32),
        w2=w(ks[9], (hidden, dim)), b2=jnp.zeros((1, dim), f32),
        g1=jnp.full((1, dim), init_values, f32),
        g2=jnp.full((1, dim), init_values, f32),
    )


def reference(x, p, num_heads):
    # Pure-JAX f32 reference of the same forward pass (weights upcast from bf16).
    B, N, D = x.shape
    hd = D // num_heads
    f32 = jnp.float32

    def ln(v, w, b):
        mu = v.mean(-1, keepdims=True)
        var = ((v - mu) ** 2).mean(-1, keepdims=True)
        return (v - mu) / jnp.sqrt(var + _LN_EPS) * w + b

    wq, wk, wv = (p["wq"].astype(f32), p["wk"].astype(f32), p["wv"].astype(f32))
    xn = ln(x, p["ln1_w"], p["ln1_b"])
    q, k, v = xn @ wq, xn @ wk, xn @ wv
    qh = q.reshape(B, N, num_heads, hd).transpose(0, 2, 1, 3)
    kh = k.reshape(B, N, num_heads, hd).transpose(0, 2, 1, 3)
    vh = v.reshape(B, N, num_heads, hd).transpose(0, 2, 1, 3)
    att = jax.nn.softmax((qh @ kh.transpose(0, 1, 3, 2)) / jnp.sqrt(1.0 * hd), axis=-1)
    o = (att @ vh).transpose(0, 2, 1, 3).reshape(B, N, D)
    x1 = x + p["g1"] * (o @ p["wo"].astype(f32))
    xn2 = ln(x1, p["ln2_w"], p["ln2_b"])
    h = jax.nn.gelu(xn2 @ p["w1"].astype(f32) + p["b1"], approximate=False)
    return x1 + p["g2"] * (h @ p["w2"].astype(f32) + p["b2"])


if __name__ == "__main__":
    # Small, module-consistent shapes: dim=32, num_heads=4, seq=8, batch=2.
    B, N, D, HEADS = 2, 8, 32, 4

    key = jax.random.PRNGKey(0)
    kx, kp = jax.random.split(key)
    x = jax.random.normal(kx, (B, N, D), jnp.float32)
    params = init_params(kp, D)

    fwd = jax.jit(layer_scale_init_block, static_argnames=("num_heads",))
    out = jax.block_until_ready(fwd(x, params, num_heads=HEADS))

    ref = reference(x, params, HEADS)
    assert out.shape == (B, N, D) and out.dtype == jnp.float32
    err = float(jnp.max(jnp.abs(out - ref)))
    assert jnp.allclose(out, ref, atol=2e-3, rtol=2e-3), err

    print("KERNEL_OK")
</pallas_src>

<mosaic_0001>
module attributes {stable_mosaic.version = 11 : i64} {
  func.func @_qkv_kernel(%arg0: i32, %arg1: i32, %arg2: memref<1x8x32xf32, #tpu.memory_space<vmem>>, %arg3: memref<1x32xf32, #tpu.memory_space<vmem>>, %arg4: memref<1x32xf32, #tpu.memory_space<vmem>>, %arg5: memref<32x32xbf16, #tpu.memory_space<vmem>>, %arg6: memref<32x32xbf16, #tpu.memory_space<vmem>>, %arg7: memref<32x32xbf16, #tpu.memory_space<vmem>>, %arg8: memref<1x8x32xbf16, #tpu.memory_space<vmem>>, %arg9: memref<1x8x32xbf16, #tpu.memory_space<vmem>>, %arg10: memref<1x8x32xbf16, #tpu.memory_space<vmem>>) attributes {dimension_semantics = [#tpu.dimension_semantics<parallel>, #tpu.dimension_semantics<parallel>], iteration_bounds = array<i64: 2, 1>, scalar_prefetch = 0 : i64, scratch_operands = 0 : i64, tpu.core_type = #tpu.core_type<tc>, window_params = [{transform_indices = @transform_0, window_bounds = array<i64: 1, 8, 32>}, {pipeline_mode = #tpu.pipeline_mode<synchronous>, transform_indices = @transform_1, window_bounds = array<i64: 1, 32>}, {pipeline_mode = #tpu.pipeline_mode<synchronous>, transform_indices = @transform_2, window_bounds = array<i64: 1, 32>}, {pipeline_mode = #tpu.pipeline_mode<synchronous>, transform_indices = @transform_3, window_bounds = array<i64: 32, 32>}, {pipeline_mode = #tpu.pipeline_mode<synchronous>, transform_indices = @transform_4, window_bounds = array<i64: 32, 32>}, {pipeline_mode = #tpu.pipeline_mode<synchronous>, transform_indices = @transform_5, window_bounds = array<i64: 32, 32>}, {transform_indices = @transform_6, window_bounds = array<i64: 1, 8, 32>}, {transform_indices = @transform_7, window_bounds = array<i64: 1, 8, 32>}, {transform_indices = @transform_8, window_bounds = array<i64: 1, 8, 32>}]} {
    %c0 = arith.constant 0 : index
    %c0_0 = arith.constant 0 : index
    %c0_1 = arith.constant 0 : index
    %0 = vector.load %arg2[%c0, %c0_0, %c0_1] : memref<1x8x32xf32, #tpu.memory_space<vmem>>, vector<1x8x32xf32>
    %1 = vector.shape_cast %0 : vector<1x8x32xf32> to vector<8x32xf32>
    %c0_2 = arith.constant 0 : index
    %c0_3 = arith.constant 0 : index
    %2 = vector.load %arg3[%c0_2, %c0_3] : memref<1x32xf32, #tpu.memory_space<vmem>>, vector<1x32xf32>
    %c0_4 = arith.constant 0 : index
    %c0_5 = arith.constant 0 : index
    %3 = vector.load %arg4[%c0_4, %c0_5] : memref<1x32xf32, #tpu.memory_space<vmem>>, vector<1x32xf32>
    %cst = arith.constant dense<0.000000e+00> : vector<8xf32>
    %4 = vector.multi_reduction <add>, %1, %cst [1] : vector<8x32xf32> to vector<8xf32>
    %5 = vector.shape_cast %4 : vector<8xf32> to vector<8x1xf32>
    %cst_6 = arith.constant 3.200000e+01 : f32
    %6 = vector.broadcast %cst_6 : f32 to vector<8x1xf32>
    %7 = arith.divf %5, %6 : vector<8x1xf32>
    %8 = vector.broadcast %7 : vector<8x1xf32> to vector<8x32xf32>
    %9 = arith.subf %1, %8 : vector<8x32xf32>
    %10 = arith.mulf %9, %9 : vector<8x32xf32>
    %cst_7 = arith.constant dense<0.000000e+00> : vector<8xf32>
    %11 = vector.multi_reduction <add>, %10, %cst_7 [1] : vector<8x32xf32> to vector<8xf32>
    %12 = vector.shape_cast %11 : vector<8xf32> to vector<8x1xf32>
    %cst_8 = arith.constant 3.200000e+01 : f32
    %13 = vector.broadcast %cst_8 : f32 to vector<8x1xf32>
    %14 = arith.divf %12, %13 : vector<8x1xf32>
    %15 = vector.broadcast %7 : vector<8x1xf32> to vector<8x32xf32>
    %16 = arith.subf %1, %15 : vector<8x32xf32>
    %cst_9 = arith.constant 9.99999974E-6 : f32
    %17 = vector.broadcast %cst_9 : f32 to vector<8x1xf32>
    %18 = arith.addf %14, %17 : vector<8x1xf32>
    %19 = math.rsqrt %18 : vector<8x1xf32>
    %20 = vector.broadcast %19 : vector<8x1xf32> to vector<8x32xf32>
    %21 = arith.mulf %16, %20 : vector<8x32xf32>
    %22 = vector.broadcast %2 : vector<1x32xf32> to vector<8x32xf32>
    %23 = arith.mulf %21, %22 : vector<8x32xf32>
    %24 = vector.broadcast %3 : vector<1x32xf32> to vector<8x32xf32>
    %25 = arith.addf %23, %24 : vector<8x32xf32>
    %26 = arith.truncf %25 : vector<8x32xf32> to vector<8x32xbf16>
    %c0_10 = arith.constant 0 : index
    %c0_11 = arith.constant 0 : index
    %27 = vector.load %arg5[%c0_10, %c0_11] : memref<32x32xbf16, #tpu.memory_space<vmem>>, vector<32x32xbf16>
    %cst_12 = arith.constant dense<0.000000e+00> : vector<8x32xf32>
    %28 = tpu.matmul %26, %27, %cst_12 {dimension_numbers = #tpu.dot_dimension_numbers<[1], [0], [0], [1], [0, 0, 1, 1], [], []>} : vector<8x32xbf16>, vector<32x32xbf16>, vector<8x32xf32> -> vector<8x32xf32>
    %c0_13 = arith.constant 0 : index
    %c0_14 = arith.constant 0 : index
    %29 = vector.load %arg6[%c0_13, %c0_14] : memref<32x32xbf16, #tpu.memory_space<vmem>>, vector<32x32xbf16>
    %cst_15 = arith.constant dense<0.000000e+00> : vector<8x32xf32>
    %30 = tpu.matmul %26, %29, %cst_15 {dimension_numbers = #tpu.dot_dimension_numbers<[1], [0], [0], [1], [0, 0, 1, 1], [], []>} : vector<8x32xbf16>, vector<32x32xbf16>, vector<8x32xf32> -> vector<8x32xf32>
    %c0_16 = arith.constant 0 : index
    %c0_17 = arith.constant 0 : index
    %31 = vector.load %arg7[%c0_16, %c0_17] : memref<32x32xbf16, #tpu.memory_space<vmem>>, vector<32x32xbf16>
    %cst_18 = arith.constant dense<0.000000e+00> : vector<8x32xf32>
    %32 = tpu.matmul %26, %31, %cst_18 {dimension_numbers = #tpu.dot_dimension_numbers<[1], [0], [0], [1], [0, 0, 1, 1], [], []>} : vector<8x32xbf16>, vector<32x32xbf16>, vector<8x32xf32> -> vector<8x32xf32>
    %cst_19 = arith.constant 0.353553385 : f32
    %33 = vector.broadcast %cst_19 : f32 to vector<8x32xf32>
    %34 = arith.mulf %28, %33 : vector<8x32xf32>
    %35 = arith.truncf %34 : vector<8x32xf32> to vector<8x32xbf16>
    %c0_20 = arith.constant 0 : index
    %c0_21 = arith.constant 0 : index
    %c0_22 = arith.constant 0 : index
    %36 = vector.load %arg8[%c0_20, %c0_21, %c0_22] : memref<1x8x32xbf16, #tpu.memory_space<vmem>>, vector<1x8x32xbf16>
    %37 = vector.shape_cast %36 : vector<1x8x32xbf16> to vector<8x32xbf16>
    %38 = vector.shape_cast %35 : vector<8x32xbf16> to vector<1x8x32xbf16>
    tpu.vector_store %arg8[%c0_20, %c0_21, %c0_22], %38 {strides = array<i32>} : memref<1x8x32xbf16, #tpu.memory_space<vmem>>, vector<1x8x32xbf16>,
    %39 = arith.truncf %30 : vector<8x32xf32> to vector<8x32xbf16>
    %c0_23 = arith.constant 0 : index
    %c0_24 = arith.constant 0 : index
    %c0_25 = arith.constant 0 : index
    %40 = vector.load %arg9[%c0_23, %c0_24, %c0_25] : memref<1x8x32xbf16, #tpu.memory_space<vmem>>, vector<1x8x32xbf16>
    %41 = vector.shape_cast %40 : vector<1x8x32xbf16> to vector<8x32xbf16>
    %42 = vector.shape_cast %39 : vector<8x32xbf16> to vector<1x8x32xbf16>
    tpu.vector_store %arg9[%c0_23, %c0_24, %c0_25], %42 {strides = array<i32>} : memref<1x8x32xbf16, #tpu.memory_space<vmem>>, vector<1x8x32xbf16>,
    %43 = arith.truncf %32 : vector<8x32xf32> to vector<8x32xbf16>
    %c0_26 = arith.constant 0 : index
    %c0_27 = arith.constant 0 : index
    %c0_28 = arith.constant 0 : index
    %44 = vector.load %arg10[%c0_26, %c0_27, %c0_28] : memref<1x8x32xbf16, #tpu.memory_space<vmem>>, vector<1x8x32xbf16>
    %45 = vector.shape_cast %44 : vector<1x8x32xbf16> to vector<8x32xbf16>
    %46 = vector.shape_cast %43 : vector<8x32xbf16> to vector<1x8x32xbf16>
    tpu.vector_store %arg10[%c0_26, %c0_27, %c0_28], %46 {strides = array<i32>} : memref<1x8x32xbf16, #tpu.memory_space<vmem>>, vector<1x8x32xbf16>,
    return
  }
  func.func @transform_0(%arg0: i32, %arg1: i32) -> (i32, i32, i32) {
    %c0_i32 = arith.constant 0 : i32
    %c0_i32_0 = arith.constant 0 : i32
    return %arg0, %arg1, %c0_i32 : i32, i32, i32
  }
  func.func @transform_1(%arg0: i32, %arg1: i32) -> (i32, i32) {
    %c0_i32 = arith.constant 0 : i32
    %c0_i32_0 = arith.constant 0 : i32
    %c0_i32_1 = arith.constant 0 : i32
    return %c0_i32, %c0_i32_0 : i32, i32
  }
  func.func @transform_2(%arg0: i32, %arg1: i32) -> (i32, i32) {
    %c0_i32 = arith.constant 0 : i32
    %c0_i32_0 = arith.constant 0 : i32
    %c0_i32_1 = arith.constant 0 : i32
    return %c0_i32, %c0_i32_0 : i32, i32
  }
  func.func @transform_3(%arg0: i32, %arg1: i32) -> (i32, i32) {
    %c0_i32 = arith.constant 0 : i32
    %c0_i32_0 = arith.constant 0 : i32
    %c0_i32_1 = arith.constant 0 : i32
    return %c0_i32, %c0_i32_0 : i32, i32
  }
  func.func @transform_4(%arg0: i32, %arg1: i32) -> (i32, i32) {
    %c0_i32 = arith.constant 0 : i32
    %c0_i32_0 = arith.constant 0 : i32
    %c0_i32_1 = arith.constant 0 : i32
    return %c0_i32, %c0_i32_0 : i32, i32
  }
  func.func @transform_5(%arg0: i32, %arg1: i32) -> (i32, i32) {
    %c0_i32 = arith.constant 0 : i32
    %c0_i32_0 = arith.constant 0 : i32
    %c0_i32_1 = arith.constant 0 : i32
    return %c0_i32, %c0_i32_0 : i32, i32
  }
  func.func @transform_6(%arg0: i32, %arg1: i32) -> (i32, i32, i32) {
    %c0_i32 = arith.constant 0 : i32
    %c0_i32_0 = arith.constant 0 : i32
    return %arg0, %arg1, %c0_i32 : i32, i32, i32
  }
  func.func @transform_7(%arg0: i32, %arg1: i32) -> (i32, i32, i32) {
    %c0_i32 = arith.constant 0 : i32
    %c0_i32_0 = arith.constant 0 : i32
    return %arg0, %arg1, %c0_i32 : i32, i32, i32
  }
  func.func @transform_8(%arg0: i32, %arg1: i32) -> (i32, i32, i32) {
    %c0_i32 = arith.constant 0 : i32
    %c0_i32_0 = arith.constant 0 : i32
    return %arg0, %arg1, %c0_i32 : i32, i32, i32
  }
}

module attributes {stable_mosaic.version = 11 : i64} {
  func.func @_attn_kernel(%arg0: i32, %arg1: i32, %arg2: memref<1x4x8x8xbf16, #tpu.memory_space<vmem>>, %arg3: memref<1x4x8x8xbf16, #tpu.memory_space<vmem>>, %arg4: memref<1x4x8x8xbf16, #tpu.memory_space<vmem>>, %arg5: memref<1x4x8x8xbf16, #tpu.memory_space<vmem>>) attributes {dimension_semantics = [#tpu.dimension_semantics<parallel>, #tpu.dimension_semantics<parallel>], iteration_bounds = array<i64: 2, 1>, scalar_prefetch = 0 : i64, scratch_operands = 0 : i64, tpu.core_type = #tpu.core_type<tc>, window_params = [{transform_indices = @transform_0, window_bounds = array<i64: 1, 4, 8, 8>}, {transform_indices = @transform_1, window_bounds = array<i64: 1, 4, 8, 8>}, {transform_indices = @transform_2, window_bounds = array<i64: 1, 4, 8, 8>}, {transform_indices = @transform_3, window_bounds = array<i64: 1, 4, 8, 8>}]} {
    %c0 = arith.constant 0 : index
    %c0_0 = arith.constant 0 : index
    %c0_1 = arith.constant 0 : index
    %c0_2 = arith.constant 0 : index
    %0 = vector.load %arg2[%c0, %c0_0, %c0_1, %c0_2] : memref<1x4x8x8xbf16, #tpu.memory_space<vmem>>, vector<1x4x8x8xbf16>
    %1 = vector.shape_cast %0 : vector<1x4x8x8xbf16> to vector<4x8x8xbf16>
    %c0_3 = arith.constant 0 : index
    %c0_4 = arith.constant 0 : index
    %c0_5 = arith.constant 0 : index
    %c0_6 = arith.constant 0 : index
    %2 = vector.load %arg3[%c0_3, %c0_4, %c0_5, %c0_6] : memref<1x4x8x8xbf16, #tpu.memory_space<vmem>>, vector<1x4x8x8xbf16>
    %3 = vector.shape_cast %2 : vector<1x4x8x8xbf16> to vector<4x8x8xbf16>
    %c0_7 = arith.constant 0 : index
    %c0_8 = arith.constant 0 : index
    %c0_9 = arith.constant 0 : index
    %c0_10 = arith.constant 0 : index
    %4 = vector.load %arg4[%c0_7, %c0_8, %c0_9, %c0_10] : memref<1x4x8x8xbf16, #tpu.memory_space<vmem>>, vector<1x4x8x8xbf16>
    %5 = vector.shape_cast %4 : vector<1x4x8x8xbf16> to vector<4x8x8xbf16>
    %cst = arith.constant dense<0.000000e+00> : vector<4x8x8xf32>
    %6 = tpu.matmul %1, %3, %cst {dimension_numbers = #tpu.dot_dimension_numbers<[2], [2], [1], [1], [0, 0, 0, 1, 1, 1], [0], [0]>} : vector<4x8x8xbf16>, vector<4x8x8xbf16>, vector<4x8x8xf32> -> vector<4x8x8xf32>
    %cst_11 = arith.constant dense<0xFF800000> : vector<4x8xf32>
    %7 = vector.multi_reduction <maximumf>, %6, %cst_11 [2] : vector<4x8x8xf32> to vector<4x8xf32>
    %8 = vector.shape_cast %7 : vector<4x8xf32> to vector<4x8x1xf32>
    %9 = vector.broadcast %8 : vector<4x8x1xf32> to vector<4x8x8xf32>
    %10 = arith.subf %6, %9 : vector<4x8x8xf32>
    %11 = math.exp %10 : vector<4x8x8xf32>
    %cst_12 = arith.constant dense<0.000000e+00> : vector<4x8xf32>
    %12 = vector.multi_reduction <add>, %11, %cst_12 [2] : vector<4x8x8xf32> to vector<4x8xf32>
    %13 = vector.shape_cast %12 : vector<4x8xf32> to vector<4x8x1xf32>
    %14 = tpu.reciprocal %13 {approx = true} : vector<4x8x1xf32> -> vector<4x8x1xf32>
    %15 = vector.broadcast %14 : vector<4x8x1xf32> to vector<4x8x8xf32>
    %16 = arith.mulf %11, %15 : vector<4x8x8xf32>
    %17 = arith.truncf %16 : vector<4x8x8xf32> to vector<4x8x8xbf16>
    %cst_13 = arith.constant dense<0.000000e+00> : vector<4x8x8xf32>
    %18 = tpu.matmul %17, %5, %cst_13 {dimension_numbers = #tpu.dot_dimension_numbers<[2], [1], [1], [2], [0, 0, 0, 1, 1, 2], [0], [0]>} : vector<4x8x8xbf16>, vector<4x8x8xbf16>, vector<4x8x8xf32> -> vector<4x8x8xf32>
    %19 = arith.truncf %18 : vector<4x8x8xf32> to vector<4x8x8xbf16>
    %c0_14 = arith.constant 0 : index
    %c0_15 = arith.constant 0 : index
    %c0_16 = arith.constant 0 : index
    %c0_17 = arith.constant 0 : index
    %20 = vector.load %arg5[%c0_14, %c0_15, %c0_16, %c0_17] : memref<1x4x8x8xbf16, #tpu.memory_space<vmem>>, vector<1x4x8x8xbf16>
    %21 = vector.shape_cast %20 : vector<1x4x8x8xbf16> to vector<4x8x8xbf16>
    %22 = vector.shape_cast %19 : vector<4x8x8xbf16> to vector<1x4x8x8xbf16>
    tpu.vector_store %arg5[%c0_14, %c0_15, %c0_16, %c0_17], %22 {strides = array<i32>} : memref<1x4x8x8xbf16, #tpu.memory_space<vmem>>, vector<1x4x8x8xbf16>,
    return
  }
  func.func @transform_0(%arg0: i32, %arg1: i32) -> (i32, i32, i32, i32) {
    %c0_i32 = arith.constant 0 : i32
    %c0_i32_0 = arith.constant 0 : i32
    %c0_i32_1 = arith.constant 0 : i32
    return %arg0, %c0_i32, %arg1, %c0_i32_0 : i32, i32, i32, i32
  }
  func.func @transform_1(%arg0: i32, %arg1: i32) -> (i32, i32, i32, i32) {
    %c0_i32 = arith.constant 0 : i32
    %c0_i32_0 = arith.constant 0 : i32
    %c0_i32_1 = arith.constant 0 : i32
    %c0_i32_2 = arith.constant 0 : i32
    return %arg0, %c0_i32, %c0_i32_0, %c0_i32_1 : i32, i32, i32, i32
  }
  func.func @transform_2(%arg0: i32, %arg1: i32) -> (i32, i32, i32, i32) {
    %c0_i32 = arith.constant 0 : i32
    %c0_i32_0 = arith.constant 0 : i32
    %c0_i32_1 = arith.constant 0 : i32
    %c0_i32_2 = arith.constant 0 : i32
    return %arg0, %c0_i32, %c0_i32_0, %c0_i32_1 : i32, i32, i32, i32
  }
  func.func @transform_3(%arg0: i32, %arg1: i32) -> (i32, i32, i32, i32) {
    %c0_i32 = arith.constant 0 : i32
    %c0_i32_0 = arith.constant 0 : i32
    %c0_i32_1 = arith.constant 0 : i32
    return %arg0, %c0_i32, %arg1, %c0_i32_0 : i32, i32, i32, i32
  }
}

module attributes {stable_mosaic.version = 11 : i64} {
  func.func @_proj_mlp_kernel(%arg0: i32, %arg1: i32, %arg2: memref<1x8x32xf32, #tpu.memory_space<vmem>>, %arg3: memref<1x8x32xbf16, #tpu.memory_space<vmem>>, %arg4: memref<32x32xbf16, #tpu.memory_space<vmem>>, %arg5: memref<1x32xf32, #tpu.memory_space<vmem>>, %arg6: memref<1x32xf32, #tpu.memory_space<vmem>>, %arg7: memref<1x32xf32, #tpu.memory_space<vmem>>, %arg8: memref<32x128xbf16, #tpu.memory_space<vmem>>, %arg9: memref<1x128xf32, #tpu.memory_space<vmem>>, %arg10: memref<128x32xbf16, #tpu.memory_space<vmem>>, %arg11: memref<1x32xf32, #tpu.memory_space<vmem>>, %arg12: memref<1x32xf32, #tpu.memory_space<vmem>>, %arg13: memref<1x8x32xf32, #tpu.memory_space<vmem>>) attributes {dimension_semantics = [#tpu.dimension_semantics<parallel>, #tpu.dimension_semantics<parallel>], iteration_bounds = array<i64: 2, 1>, scalar_prefetch = 0 : i64, scratch_operands = 0 : i64, tpu.core_type = #tpu.core_type<tc>, window_params = [{transform_indices = @transform_0, window_bounds = array<i64: 1, 8, 32>}, {transform_indices = @transform_1, window_bounds = array<i64: 1, 8, 32>}, {pipeline_mode = #tpu.pipeline_mode<synchronous>, transform_indices = @transform_2, window_bounds = array<i64: 32, 32>}, {pipeline_mode = #tpu.pipeline_mode<synchronous>, transform_indices = @transform_3, window_bounds = array<i64: 1, 32>}, {pipeline_mode = #tpu.pipeline_mode<synchronous>, transform_indices = @transform_4, window_bounds = array<i64: 1, 32>}, {pipeline_mode = #tpu.pipeline_mode<synchronous>, transform_indices = @transform_5, window_bounds = array<i64: 1, 32>}, {pipeline_mode = #tpu.pipeline_mode<synchronous>, transform_indices = @transform_6, window_bounds = array<i64: 32, 128>}, {pipeline_mode = #tpu.pipeline_mode<synchronous>, transform_indices = @transform_7, window_bounds = array<i64: 1, 128>}, {pipeline_mode = #tpu.pipeline_mode<synchronous>, transform_indices = @transform_8, window_bounds = array<i64: 128, 32>}, {pipeline_mode = #tpu.pipeline_mode<synchronous>, transform_indices = @transform_9, window_bounds = array<i64: 1, 32>}, {pipeline_mode = #tpu.pipeline_mode<synchronous>, transform_indices = @transform_10, window_bounds = array<i64: 1, 32>}, {transform_indices = @transform_11, window_bounds = array<i64: 1, 8, 32>}]} {
    %c0 = arith.constant 0 : index
    %c0_0 = arith.constant 0 : index
    %c0_1 = arith.constant 0 : index
    %0 = vector.load %arg3[%c0, %c0_0, %c0_1] : memref<1x8x32xbf16, #tpu.memory_space<vmem>>, vector<1x8x32xbf16>
    %1 = vector.shape_cast %0 : vector<1x8x32xbf16> to vector<8x32xbf16>
    %c0_2 = arith.constant 0 : index
    %c0_3 = arith.constant 0 : index
    %2 = vector.load %arg4[%c0_2, %c0_3] : memref<32x32xbf16, #tpu.memory_space<vmem>>, vector<32x32xbf16>
    %cst = arith.constant dense<0.000000e+00> : vector<8x32xf32>
    %3 = tpu.matmul %1, %2, %cst {dimension_numbers = #tpu.dot_dimension_numbers<[1], [0], [0], [1], [0, 0, 1, 1], [], []>} : vector<8x32xbf16>, vector<32x32xbf16>, vector<8x32xf32> -> vector<8x32xf32>
    %c0_4 = arith.constant 0 : index
    %c0_5 = arith.constant 0 : index
    %c0_6 = arith.constant 0 : index
    %4 = vector.load %arg2[%c0_4, %c0_5, %c0_6] : memref<1x8x32xf32, #tpu.memory_space<vmem>>, vector<1x8x32xf32>
    %5 = vector.shape_cast %4 : vector<1x8x32xf32> to vector<8x32xf32>
    %c0_7 = arith.constant 0 : index
    %c0_8 = arith.constant 0 : index
    %6 = vector.load %arg5[%c0_7, %c0_8] : memref<1x32xf32, #tpu.memory_space<vmem>>, vector<1x32xf32>
    %7 = vector.broadcast %6 : vector<1x32xf32> to vector<8x32xf32>
    %8 = arith.mulf %7, %3 : vector<8x32xf32>
    %9 = arith.addf %5, %8 : vector<8x32xf32>
    %c0_9 = arith.constant 0 : index
    %c0_10 = arith.constant 0 : index
    %10 = vector.load %arg6[%c0_9, %c0_10] : memref<1x32xf32, #tpu.memory_space<vmem>>, vector<1x32xf32>
    %c0_11 = arith.constant 0 : index
    %c0_12 = arith.constant 0 : index
    %11 = vector.load %arg7[%c0_11, %c0_12] : memref<1x32xf32, #tpu.memory_space<vmem>>, vector<1x32xf32>
    %cst_13 = arith.constant dense<0.000000e+00> : vector<8xf32>
    %12 = vector.multi_reduction <add>, %9, %cst_13 [1] : vector<8x32xf32> to vector<8xf32>
    %13 = vector.shape_cast %12 : vector<8xf32> to vector<8x1xf32>
    %cst_14 = arith.constant 3.200000e+01 : f32
    %14 = vector.broadcast %cst_14 : f32 to vector<8x1xf32>
    %15 = arith.divf %13, %14 : vector<8x1xf32>
    %16 = vector.broadcast %15 : vector<8x1xf32> to vector<8x32xf32>
    %17 = arith.subf %9, %16 : vector<8x32xf32>
    %18 = arith.mulf %17, %17 : vector<8x32xf32>
    %cst_15 = arith.constant dense<0.000000e+00> : vector<8xf32>
    %19 = vector.multi_reduction <add>, %18, %cst_15 [1] : vector<8x32xf32> to vector<8xf32>
    %20 = vector.shape_cast %19 : vector<8xf32> to vector<8x1xf32>
    %cst_16 = arith.constant 3.200000e+01 : f32
    %21 = vector.broadcast %cst_16 : f32 to vector<8x1xf32>
    %22 = arith.divf %20, %21 : vector<8x1xf32>
    %23 = vector.broadcast %15 : vector<8x1xf32> to vector<8x32xf32>
    %24 = arith.subf %9, %23 : vector<8x32xf32>
    %cst_17 = arith.constant 9.99999974E-6 : f32
    %25 = vector.broadcast %cst_17 : f32 to vector<8x1xf32>
    %26 = arith.addf %22, %25 : vector<8x1xf32>
    %27 = math.rsqrt %26 : vector<8x1xf32>
    %28 = vector.broadcast %27 : vector<8x1xf32> to vector<8x32xf32>
    %29 = arith.mulf %24, %28 : vector<8x32xf32>
    %30 = vector.broadcast %10 : vector<1x32xf32> to vector<8x32xf32>
    %31 = arith.mulf %29, %30 : vector<8x32xf32>
    %32 = vector.broadcast %11 : vector<1x32xf32> to vector<8x32xf32>
    %33 = arith.addf %31, %32 : vector<8x32xf32>
    %34 = arith.truncf %33 : vector<8x32xf32> to vector<8x32xbf16>
    %c0_18 = arith.constant 0 : index
    %c0_19 = arith.constant 0 : index
    %35 = vector.load %arg8[%c0_18, %c0_19] : memref<32x128xbf16, #tpu.memory_space<vmem>>, vector<32x128xbf16>
    %cst_20 = arith.constant dense<0.000000e+00> : vector<8x128xf32>
    %36 = tpu.matmul %34, %35, %cst_20 {dimension_numbers = #tpu.dot_dimension_numbers<[1], [0], [0], [1], [0, 0, 1, 1], [], []>} : vector<8x32xbf16>, vector<32x128xbf16>, vector<8x128xf32> -> vector<8x128xf32>
    %c0_21 = arith.constant 0 : index
    %c0_22 = arith.constant 0 : index
    %37 = vector.load %arg9[%c0_21, %c0_22] : memref<1x128xf32, #tpu.memory_space<vmem>>, vector<1x128xf32>
    %38 = vector.broadcast %37 : vector<1x128xf32> to vector<8x128xf32>
    %39 = arith.addf %36, %38 : vector<8x128xf32>
    %cst_23 = arith.constant 5.000000e-01 : f32
    %40 = vector.broadcast %cst_23 : f32 to vector<8x128xf32>
    %41 = arith.mulf %40, %39 : vector<8x128xf32>
    %cst_24 = arith.constant 0.707106769 : f32
    %42 = vector.broadcast %cst_24 : f32 to vector<8x128xf32>
    %43 = arith.mulf %39, %42 : vector<8x128xf32>
    %44 = math.erf %43 : vector<8x128xf32>
    %cst_25 = arith.constant 1.000000e+00 : f32
    %45 = vector.broadcast %cst_25 : f32 to vector<8x128xf32>
    %46 = arith.addf %45, %44 : vector<8x128xf32>
    %47 = arith.mulf %41, %46 : vector<8x128xf32>
    %48 = arith.truncf %47 : vector<8x128xf32> to vector<8x128xbf16>
    %c0_26 = arith.constant 0 : index
    %c0_27 = arith.constant 0 : index
    %49 = vector.load %arg10[%c0_26, %c0_27] : memref<128x32xbf16, #tpu.memory_space<vmem>>, vector<128x32xbf16>
    %cst_28 = arith.constant dense<0.000000e+00> : vector<8x32xf32>
    %50 = tpu.matmul %48, %49, %cst_28 {dimension_numbers = #tpu.dot_dimension_numbers<[1], [0], [0], [1], [0, 0, 1, 1], [], []>} : vector<8x128xbf16>, vector<128x32xbf16>, vector<8x32xf32> -> vector<8x32xf32>
    %c0_29 = arith.constant 0 : index
    %c0_30 = arith.constant 0 : index
    %51 = vector.load %arg11[%c0_29, %c0_30] : memref<1x32xf32, #tpu.memory_space<vmem>>, vector<1x32xf32>
    %52 = vector.broadcast %51 : vector<1x32xf32> to vector<8x32xf32>
    %53 = arith.addf %50, %52 : vector<8x32xf32>
    %c0_31 = arith.constant 0 : index
    %c0_32 = arith.constant 0 : index
    %54 = vector.load %arg12[%c0_31, %c0_32] : memref<1x32xf32, #tpu.memory_space<vmem>>, vector<1x32xf32>
    %55 = vector.broadcast %54 : vector<1x32xf32> to vector<8x32xf32>
    %56 = arith.mulf %55, %53 : vector<8x32xf32>
    %57 = arith.addf %9, %56 : vector<8x32xf32>
    %c0_33 = arith.constant 0 : index
    %c0_34 = arith.constant 0 : index
    %c0_35 = arith.constant 0 : index
    %58 = vector.load %arg13[%c0_33, %c0_34, %c0_35] : memref<1x8x32xf32, #tpu.memory_space<vmem>>, vector<1x8x32xf32>
    %59 = vector.shape_cast %58 : vector<1x8x32xf32> to vector<8x32xf32>
    %60 = vector.shape_cast %57 : vector<8x32xf32> to vector<1x8x32xf32>
    tpu.vector_store %arg13[%c0_33, %c0_34, %c0_35], %60 {strides = array<i32>} : memref<1x8x32xf32, #tpu.memory_space<vmem>>, vector<1x8x32xf32>,
    return
  }
  func.func @transform_0(%arg0: i32, %arg1: i32) -> (i32, i32, i32) {
    %c0_i32 = arith.constant 0 : i32
    %c0_i32_0 = arith.constant 0 : i32
    return %arg0, %arg1, %c0_i32 : i32, i32, i32
  }
  func.func @transform_1(%arg0: i32, %arg1: i32) -> (i32, i32, i32) {
    %c0_i32 = arith.constant 0 : i32
    %c0_i32_0 = arith.constant 0 : i32
    return %arg0, %arg1, %c0_i32 : i32, i32, i32
  }
  func.func @transform_2(%arg0: i32, %arg1: i32) -> (i32, i32) {
    %c0_i32 = arith.constant 0 : i32
    %c0_i32_0 = arith.constant 0 : i32
    %c0_i32_1 = arith.constant 0 : i32
    return %c0_i32, %c0_i32_0 : i32, i32
  }
  func.func @transform_3(%arg0: i32, %arg1: i32) -> (i32, i32) {
    %c0_i32 = arith.constant 0 : i32
    %c0_i32_0 = arith.constant 0 : i32
    %c0_i32_1 = arith.constant 0 : i32
    return %c0_i32, %c0_i32_0 : i32, i32
  }
  func.func @transform_4(%arg0: i32, %arg1: i32) -> (i32, i32) {
    %c0_i32 = arith.constant 0 : i32
    %c0_i32_0 = arith.constant 0 : i32
    %c0_i32_1 = arith.constant 0 : i32
    return %c0_i32, %c0_i32_0 : i32, i32
  }
  func.func @transform_5(%arg0: i32, %arg1: i32) -> (i32, i32) {
    %c0_i32 = arith.constant 0 : i32
    %c0_i32_0 = arith.constant 0 : i32
    %c0_i32_1 = arith.constant 0 : i32
    return %c0_i32, %c0_i32_0 : i32, i32
  }
  func.func @transform_6(%arg0: i32, %arg1: i32) -> (i32, i32) {
    %c0_i32 = arith.constant 0 : i32
    %c0_i32_0 = arith.constant 0 : i32
    %c0_i32_1 = arith.constant 0 : i32
    return %c0_i32, %c0_i32_0 : i32, i32
  }
  func.func @transform_7(%arg0: i32, %arg1: i32) -> (i32, i32) {
    %c0_i32 = arith.constant 0 : i32
    %c0_i32_0 = arith.constant 0 : i32
    %c0_i32_1 = arith.constant 0 : i32
    return %c0_i32, %c0_i32_0 : i32, i32
  }
  func.func @transform_8(%arg0: i32, %arg1: i32) -> (i32, i32) {
    %c0_i32 = arith.constant 0 : i32
    %c0_i32_0 = arith.constant 0 : i32
    %c0_i32_1 = arith.constant 0 : i32
    return %c0_i32, %c0_i32_0 : i32, i32
  }
  func.func @transform_9(%arg0: i32, %arg1: i32) -> (i32, i32) {
    %c0_i32 = arith.constant 0 : i32
    %c0_i32_0 = arith.constant 0 : i32
    %c0_i32_1 = arith.constant 0 : i32
    return %c0_i32, %c0_i32_0 : i32, i32
  }
  func.func @transform_10(%arg0: i32, %arg1: i32) -> (i32, i32) {
    %c0_i32 = arith.constant 0 : i32
    %c0_i32_0 = arith.constant 0 : i32
    %c0_i32_1 = arith.constant 0 : i32
    return %c0_i32, %c0_i32_0 : i32, i32
  }
  func.func @transform_11(%arg0: i32, %arg1: i32) -> (i32, i32, i32) {
    %c0_i32 = arith.constant 0 : i32
    %c0_i32_0 = arith.constant 0 : i32
    return %arg0, %arg1, %c0_i32 : i32, i32, i32
  }
}

</mosaic_0001>

<llo_original>
// kernel: layer_scale_init_block.5
$region0: #{layer_scale_init_block.5}
  #allocation0 [shape = 'u32[]', space=smem, size = 0x4, offset = 0x4, fixed_abs, tag = 'smem constant byte address 0x4 - core index']
  #allocation1 [shape = 'u32[144,128]{1,0:T(1,128)}', space=vmem, size = 0x12000, scoped, tag = 'internal scratch']
  %s0 = inlined_call_operand.vmem [shape: f32[2,8,32], index: 0, kind: input, shape index: {}]
  %s1 = inlined_call_operand.vmem [shape: bf16[2,8,32], index: 1, kind: input, shape index: {}]
  %s2 = inlined_call_operand.vmem [shape: bf16[32,32], index: 2, kind: input, shape index: {}]
  %s3 = inlined_call_operand.vmem [shape: f32[1,32], index: 3, kind: input, shape index: {}]
  %s4 = inlined_call_operand.vmem [shape: f32[1,32], index: 4, kind: input, shape index: {}]
  %s5 = inlined_call_operand.vmem [shape: f32[1,32], index: 5, kind: input, shape index: {}]
  %s6 = inlined_call_operand.vmem [shape: bf16[32,128], index: 6, kind: input, shape index: {}]
  %s7 = inlined_call_operand.vmem [shape: f32[1,128], index: 7, kind: input, shape index: {}]
  %s8 = inlined_call_operand.vmem [shape: bf16[128,32], index: 8, kind: input, shape index: {}]
  %s9 = inlined_call_operand.vmem [shape: f32[1,32], index: 9, kind: input, shape index: {}]
  %s10 = inlined_call_operand.vmem [shape: f32[1,32], index: 10, kind: input, shape index: {}]
  %s11 = inlined_call_operand.hbm [shape: f32[2,8,32], index: 11, kind: output, shape index: {}]
  %s12 = sld [smem:[#allocation0]]
  $region77: #{layer_scale_init_block.5} parent=0
    _
  %s14 = ssub.s32 1, %s12
  %s15 = scalar_select 0, %s14, %s12
  $region1: #{layer_scale_init_block.5} parent=0
    #allocation2 [shape = 'u8[8192]{0}', space=vmem, size = 0x2000, scoped, tag = 'output window, operand 0']
    #allocation3 [shape = 's32[2]{0}', space=sflag, size = 0x8, scoped, tag = 'scoped memory for layer_scale_init_block.5']
    %16 = vsyncpa [#allocation3], 0
    %s17 = scalar_lea.sflag [#allocation3], 1
    %18 = vsyncpa %s17, 0
    loop: start=0, step=1, limit=4
    $region2: #{layer_scale_init_block.5} parent=1 // loop_pre_header
      _
    $region3: #{layer_scale_init_block.5} parent=1 // loop_header
      %s20 = sphi 0, %s24
      %p21 = scmp.ge.s32.totalorder %s20, 4
      %s27 = sphi 0, %s39
      %s28 = sphi 0, %s35
      %s29 = sphi 0, %s27
      %s30 = sphi 0, %s28
      %s31 = sphi 0, %s29
      %s32 = sphi 0, %s30
      %s44 = sphi 0, %s46
      %s47 = sphi 0, %s44
      %s48 = sphi 0, %s47
      %s64 = sphi 0, %s48
      %s72 = sphi 0, %s74
      %s75 = sphi 0, %s72
      %s76 = sphi 0, %s75
      %s92 = sphi 0, %s76
      %s96 = sphi 0, %s96
      %s98 = sphi 0, %s96
      %s99 = sphi 0, %s98
      %s113 = sphi 0, %s99
      %s117 = sphi 0, %s117
      %s119 = sphi 0, %s117
      %s120 = sphi 0, %s119
      %s134 = sphi 0, %s120
      %s138 = sphi 0, %s138
      %s140 = sphi 0, %s138
      %s141 = sphi 0, %s140
      %s155 = sphi 0, %s141
      %s159 = sphi 0, %s159
      %s161 = sphi 0, %s159
      %s162 = sphi 0, %s161
      %s176 = sphi 0, %s162
      %s180 = sphi 0, %s180
      %s182 = sphi 0, %s180
      %s183 = sphi 0, %s182
      %s197 = sphi 0, %s183
      %s201 = sphi 0, %s201
      %s203 = sphi 0, %s201
      %s204 = sphi 0, %s203
      %s218 = sphi 0, %s204
      %s222 = sphi 0, %s222
      %s224 = sphi 0, %s222
      %s225 = sphi 0, %s224
      %s239 = sphi 0, %s225
      %s243 = sphi 0, %s243
      %s245 = sphi 0, %s243
      %s246 = sphi 0, %s245
      %s260 = sphi 0, %s246
      %s264 = sphi 0, %s264
      %s266 = sphi 0, %s264
      %s267 = sphi 0, %s266
      %s281 = sphi 0, %s267
      %s289 = sphi 0, %s291
      %s292 = sphi 0, %s289
      %s293 = sphi 0, %s292
      %s309 = sphi 0, %s293
    $region4: #{layer_scale_init_block.5} parent=1 // loop_header_branch
      %23 = sbr.rel (%p21) target = $region8
    $region5: #{layer_scale_init_block.5} parent=1 // loop_body
      %s25 = ssub.s32 %s20, 1
      %s26 = ssub.s32 %s20, 2
      %s33 = sadd.s32 1, %s28
      %p34 = scmp.ge.s32.totalorder %s33, 1
      %s35 = scalar_select %p34, 0, %s33
      %s36 = sadd.s32 1, %s27
      %s37 = scalar_select %p34, %s36, %s27
      %p38 = scmp.ge.s32.totalorder %s37, 2
      %s39 = scalar_select %p38, 0, %s37
      %s40 = ssub.s32 %s27, %s39
      %s41 = ssub.s32 %s28, %s35
      %s42 = sor.u32 %s40, %s41
      %p43 = scmp.eq.s32.totalorder %s42, 0
      %s45 = sadd.s32 %s44, 1
      %s46 = scalar_select %p43, %s44, %s45
      %p49 = pneg %p43
      %p50 = scmp.eq.s32.totalorder %s20, 1
      %p51 = por %p49, %p50
      %p52 = scmp.ne.s32.totalorder %s44, %s47
      %p53 = scmp.eq.s32.totalorder %s20, 0
      %p54 = por %p52, %p53
      %p55 = scmp.ne.s32.totalorder %s44, %s47
      %p56 = scmp.eq.s32.totalorder %s25, 1
      %p57 = por %p55, %p56
      %p58 = scmp.ne.s32.totalorder %s47, %s48
      %p59 = scmp.eq.s32.totalorder %s25, 0
      %p60 = por %p58, %p59
      %p61 = scmp.ne.s32.totalorder %s47, %s48
      %p62 = scmp.eq.s32.totalorder %s26, 1
      %p63 = por %p61, %p62
      %p65 = scmp.ne.s32.totalorder %s48, %s64
      %p66 = scmp.eq.s32.totalorder %s26, 0
      %p67 = por %p65, %p66
      %s68 = ssub.s32 %s27, %s39
      %s69 = ssub.s32 %s28, %s35
      %s70 = sor.u32 %s68, %s69
      %p71 = scmp.eq.s32.totalorder %s70, 0
      %s73 = sadd.s32 %s72, 1
      %s74 = scalar_select %p71, %s72, %s73
      %p77 = pneg %p71
      %p78 = scmp.eq.s32.totalorder %s20, 1
      %p79 = por %p77, %p78
      %p80 = scmp.ne.s32.totalorder %s72, %s75
      %p81 = scmp.eq.s32.totalorder %s20, 0
      %p82 = por %p80, %p81
      %p83 = scmp.ne.s32.totalorder %s72, %s75
      %p84 = scmp.eq.s32.totalorder %s25, 1
      %p85 = por %p83, %p84
      %p86 = scmp.ne.s32.totalorder %s75, %s76
      %p87 = scmp.eq.s32.totalorder %s25, 0
      %p88 = por %p86, %p87
      %p89 = scmp.ne.s32.totalorder %s75, %s76
      %p90 = scmp.eq.s32.totalorder %s26, 1
      %p91 = por %p89, %p90
      %p93 = scmp.ne.s32.totalorder %s76, %s92
      %p94 = scmp.eq.s32.totalorder %s26, 0
      %p95 = por %p93, %p94
      %s97 = sadd.s32 %s96, 1
      %p100 = scmp.eq.s32.totalorder %s20, 1
      %p101 = scmp.ne.s32.totalorder %s96, %s98
      %p102 = scmp.eq.s32.totalorder %s20, 0
      %p103 = por %p101, %p102
      %p104 = scmp.ne.s32.totalorder %s96, %s98
      %p105 = scmp.eq.s32.totalorder %s25, 1
      %p106 = por %p104, %p105
      %p107 = scmp.ne.s32.totalorder %s98, %s99
      %p108 = scmp.eq.s32.totalorder %s25, 0
      %p109 = por %p107, %p108
      %p110 = scmp.ne.s32.totalorder %s98, %s99
      %p111 = scmp.eq.s32.totalorder %s26, 1
      %p112 = por %p110, %p111
      %p114 = scmp.ne.s32.totalorder %s99, %s113
      %p115 = scmp.eq.s32.totalorder %s26, 0
      %p116 = por %p114, %p115
      %s118 = sadd.s32 %s117, 1
      %p121 = scmp.eq.s32.totalorder %s20, 1
      %p122 = scmp.ne.s32.totalorder %s117, %s119
      %p123 = scmp.eq.s32.totalorder %s20, 0
      %p124 = por %p122, %p123
      %p125 = scmp.ne.s32.totalorder %s117, %s119
      %p126 = scmp.eq.s32.totalorder %s25, 1
      %p127 = por %p125, %p126
      %p128 = scmp.ne.s32.totalorder %s119, %s120
      %p129 = scmp.eq.s32.totalorder %s25, 0
      %p130 = por %p128, %p129
      %p131 = scmp.ne.s32.totalorder %s119, %s120
      %p132 = scmp.eq.s32.totalorder %s26, 1
      %p133 = por %p131, %p132
      %p135 = scmp.ne.s32.totalorder %s120, %s134
      %p136 = scmp.eq.s32.totalorder %s26, 0
      %p137 = por %p135, %p136
      %s139 = sadd.s32 %s138, 1
      %p142 = scmp.eq.s32.totalorder %s20, 1
      %p143 = scmp.ne.s32.totalorder %s138, %s140
      %p144 = scmp.eq.s32.totalorder %s20, 0
      %p145 = por %p143, %p144
      %p146 = scmp.ne.s32.totalorder %s138, %s140
      %p147 = scmp.eq.s32.totalorder %s25, 1
      %p148 = por %p146, %p147
      %p149 = scmp.ne.s32.totalorder %s140, %s141
      %p150 = scmp.eq.s32.totalorder %s25, 0
      %p151 = por %p149, %p150
      %p152 = scmp.ne.s32.totalorder %s140, %s141
      %p153 = scmp.eq.s32.totalorder %s26, 1
      %p154 = por %p152, %p153
      %p156 = scmp.ne.s32.totalorder %s141, %s155
      %p157 = scmp.eq.s32.totalorder %s26, 0
      %p158 = por %p156, %p157
      %s160 = sadd.s32 %s159, 1
      %p163 = scmp.eq.s32.totalorder %s20, 1
      %p164 = scmp.ne.s32.totalorder %s159, %s161
      %p165 = scmp.eq.s32.totalorder %s20, 0
      %p166 = por %p164, %p165
      %p167 = scmp.ne.s32.totalorder %s159, %s161
      %p168 = scmp.eq.s32.totalorder %s25, 1
      %p169 = por %p167, %p168
      %p170 = scmp.ne.s32.totalorder %s161, %s162
      %p171 = scmp.eq.s32.totalorder %s25, 0
      %p172 = por %p170, %p171
      %p173 = scmp.ne.s32.totalorder %s161, %s162
      %p174 = scmp.eq.s32.totalorder %s26, 1
      %p175 = por %p173, %p174
      %p177 = scmp.ne.s32.totalorder %s162, %s176
      %p178 = scmp.eq.s32.totalorder %s26, 0
      %p179 = por %p177, %p178
      %s181 = sadd.s32 %s180, 1
      %p184 = scmp.eq.s32.totalorder %s20, 1
      %p185 = scmp.ne.s32.totalorder %s180, %s182
      %p186 = scmp.eq.s32.totalorder %s20, 0
      %p187 = por %p185, %p186
      %p188 = scmp.ne.s32.totalorder %s180, %s182
      %p189 = scmp.eq.s32.totalorder %s25, 1
      %p190 = por %p188, %p189
      %p191 = scmp.ne.s32.totalorder %s182, %s183
      %p192 = scmp.eq.s32.totalorder %s25, 0
      %p193 = por %p191, %p192
      %p194 = scmp.ne.s32.totalorder %s182, %s183
      %p195 = scmp.eq.s32.totalorder %s26, 1
      %p196 = por %p194, %p195
      %p198 = scmp.ne.s32.totalorder %s183, %s197
      %p199 = scmp.eq.s32.totalorder %s26, 0
      %p200 = por %p198, %p199
      %s202 = sadd.s32 %s201, 1
      %p205 = scmp.eq.s32.totalorder %s20, 1
      %p206 = scmp.ne.s32.totalorder %s201, %s203
      %p207 = scmp.eq.s32.totalorder %s20, 0
      %p208 = por %p206, %p207
      %p209 = scmp.ne.s32.totalorder %s201, %s203
      %p210 = scmp.eq.s32.totalorder %s25, 1
      %p211 = por %p209, %p210
      %p212 = scmp.ne.s32.totalorder %s203, %s204
      %p213 = scmp.eq.s32.totalorder %s25, 0
      %p214 = por %p212, %p213
      %p215 = scmp.ne.s32.totalorder %s203, %s204
      %p216 = scmp.eq.s32.totalorder %s26, 1
      %p217 = por %p215, %p216
      %p219 = scmp.ne.s32.totalorder %s204, %s218
      %p220 = scmp.eq.s32.totalorder %s26, 0
      %p221 = por %p219, %p220
      %s223 = sadd.s32 %s222, 1
      %p226 = scmp.eq.s32.totalorder %s20, 1
      %p227 = scmp.ne.s32.totalorder %s222, %s224
      %p228 = scmp.eq.s32.totalorder %s20, 0
      %p229 = por %p227, %p228
      %p230 = scmp.ne.s32.totalorder %s222, %s224
      %p231 = scmp.eq.s32.totalorder %s25, 1
      %p232 = por %p230, %p231
      %p233 = scmp.ne.s32.totalorder %s224, %s225
      %p234 = scmp.eq.s32.totalorder %s25, 0
      %p235 = por %p233, %p234
      %p236 = scmp.ne.s32.totalorder %s224, %s225
      %p237 = scmp.eq.s32.totalorder %s26, 1
      %p238 = por %p236, %p237
      %p240 = scmp.ne.s32.totalorder %s225, %s239
      %p241 = scmp.eq.s32.totalorder %s26, 0
      %p242 = por %p240, %p241
      %s244 = sadd.s32 %s243, 1
      %p247 = scmp.eq.s32.totalorder %s20, 1
      %p248 = scmp.ne.s32.totalorder %s243, %s245
      %p249 = scmp.eq.s32.totalorder %s20, 0
      %p250 = por %p248, %p249
      %p251 = scmp.ne.s32.totalorder %s243, %s245
      %p252 = scmp.eq.s32.totalorder %s25, 1
      %p253 = por %p251, %p252
      %p254 = scmp.ne.s32.totalorder %s245, %s246
      %p255 = scmp.eq.s32.totalorder %s25, 0
      %p256 = por %p254, %p255
      %p257 = scmp.ne.s32.totalorder %s245, %s246
      %p258 = scmp.eq.s32.totalorder %s26, 1
      %p259 = por %p257, %p258
      %p261 = scmp.ne.s32.totalorder %s246, %s260
      %p262 = scmp.eq.s32.totalorder %s26, 0
      %p263 = por %p261, %p262
      %s265 = sadd.s32 %s264, 1
      %p268 = scmp.eq.s32.totalorder %s20, 1
      %p269 = scmp.ne.s32.totalorder %s264, %s266
      %p270 = scmp.eq.s32.totalorder %s20, 0
      %p271 = por %p269, %p270
      %p272 = scmp.ne.s32.totalorder %s264, %s266
      %p273 = scmp.eq.s32.totalorder %s25, 1
      %p274 = por %p272, %p273
      %p275 = scmp.ne.s32.totalorder %s266, %s267
      %p276 = scmp.eq.s32.totalorder %s25, 0
      %p277 = por %p275, %p276
      %p278 = scmp.ne.s32.totalorder %s266, %s267
      %p279 = scmp.eq.s32.totalorder %s26, 1
      %p280 = por %p278, %p279
      %p282 = scmp.ne.s32.totalorder %s267, %s281
      %p283 = scmp.eq.s32.totalorder %s26, 0
      %p284 = por %p282, %p283
      %s285 = ssub.s32 %s27, %s39
      %s286 = ssub.s32 %s28, %s35
      %s287 = sor.u32 %s285, %s286
      %p288 = scmp.eq.s32.totalorder %s287, 0
      %s290 = sadd.s32 %s289, 1
      %s291 = scalar_select %p288, %s289, %s290
      %p294 = pneg %p288
      %p295 = scmp.eq.s32.totalorder %s20, 1
      %p296 = por %p294, %p295
      %p297 = scmp.ne.s32.totalorder %s289, %s292
      %p298 = scmp.eq.s32.totalorder %s20, 0
      %p299 = por %p297, %p298
      %p300 = scmp.ne.s32.totalorder %s289, %s292
      %p301 = scmp.eq.s32.totalorder %s25, 1
      %p302 = por %p300, %p301
      %p303 = scmp.ne.s32.totalorder %s292, %s293
      %p304 = scmp.eq.s32.totalorder %s25, 0
      %p305 = por %p303, %p304
      %p306 = scmp.ne.s32.totalorder %s292, %s293
      %p307 = scmp.eq.s32.totalorder %s26, 1
      %p308 = por %p306, %p307
      %p310 = scmp.ne.s32.totalorder %s293, %s309
      %p311 = scmp.eq.s32.totalorder %s26, 0
      %p312 = por %p310, %p311
      %p313 = scmp.le.s32.totalorder 1, %s20
      %p314 = scmp.lt.s32.totalorder %s20, 3
      %p315 = pnand %p313, %p314
      %p316 = pneg %p315
      // Predicated region
      $region9: #{layer_scale_init_block.5} parent=5 // pred_check
        _
      $region10: #{layer_scale_init_block.5} parent=5 // pred_check_branch
        %318 = sbr.rel (%p315) target = $region12
      $region11: #{layer_scale_init_block.5} parent=5 // pred_region
        %s319 = ssub.s32 %s20, 1
        // Predicated region
        $region13: #{layer_scale_init_block.5} parent=11 // pred_check
          %p320 = pneg %p109
        $region14: #{layer_scale_init_block.5} parent=11 // pred_check_branch
          %322 = sbr.rel (%p320) target = $region16
        $region15: #{layer_scale_init_block.5} parent=11 // pred_region
          _
        $region16: #{layer_scale_init_block.5} parent=11 // pred_fallthru
          _
        // Predicated region
        $region17: #{layer_scale_init_block.5} parent=11 // pred_check
          %p323 = pneg %p130
        $region18: #{layer_scale_init_block.5} parent=11 // pred_check_branch
          %325 = sbr.rel (%p323) target = $region20
        $region19: #{layer_scale_init_block.5} parent=11 // pred_region
          _
        $region20: #{layer_scale_init_block.5} parent=11 // pred_fallthru
          _
        // Predicated region
        $region21: #{layer_scale_init_block.5} parent=11 // pred_check
          %p326 = pneg %p151
        $region22: #{layer_scale_init_block.5} parent=11 // pred_check_branch
          %328 = sbr.rel (%p326) target = $region24
        $region23: #{layer_scale_init_block.5} parent=11 // pred_region
          _
        $region24: #{layer_scale_init_block.5} parent=11 // pred_fallthru
          _
        // Predicated region
        $region25: #{layer_scale_init_block.5} parent=11 // pred_check
          %p329 = pneg %p172
        $region26: #{layer_scale_init_block.5} parent=11 // pred_check_branch
          %331 = sbr.rel (%p329) target = $region28
        $region27: #{layer_scale_init_block.5} parent=11 // pred_region
          _
        $region28: #{layer_scale_init_block.5} parent=11 // pred_fallthru
          _
        // Predicated region
        $region29: #{layer_scale_init_block.5} parent=11 // pred_check
          %p332 = pneg %p193
        $region30: #{layer_scale_init_block.5} parent=11 // pred_check_branch
          %334 = sbr.rel (%p332) target = $region32
        $region31: #{layer_scale_init_block.5} parent=11 // pred_region
          _
        $region32: #{layer_scale_init_block.5} parent=11 // pred_fallthru
          _
        // Predicated region
        $region33: #{layer_scale_init_block.5} parent=11 // pred_check
          %p335 = pneg %p214
        $region34: #{layer_scale_init_block.5} parent=11 // pred_check_branch
          %337 = sbr.rel (%p335) target = $region36
        $region35: #{layer_scale_init_block.5} parent=11 // pred_region
          _
        $region36: #{layer_scale_init_block.5} parent=11 // pred_fallthru
          _
        // Predicated region
        $region37: #{layer_scale_init_block.5} parent=11 // pred_check
          %p338 = pneg %p235
        $region38: #{layer_scale_init_block.5} parent=11 // pred_check_branch
          %340 = sbr.rel (%p338) target = $region40
        $region39: #{layer_scale_init_block.5} parent=11 // pred_region
          _
        $region40: #{layer_scale_init_block.5} parent=11 // pred_fallthru
          _
        // Predicated region
        $region41: #{layer_scale_init_block.5} parent=11 // pred_check
          %p341 = pneg %p256
        $region42: #{layer_scale_init_block.5} parent=11 // pred_check_branch
          %343 = sbr.rel (%p341) target = $region44
        $region43: #{layer_scale_init_block.5} parent=11 // pred_region
          _
        $region44: #{layer_scale_init_block.5} parent=11 // pred_fallthru
          _
        // Predicated region
        $region45: #{layer_scale_init_block.5} parent=11 // pred_check
          %p344 = pneg %p277
        $region46: #{layer_scale_init_block.5} parent=11 // pred_check_branch
          %346 = sbr.rel (%p344) target = $region48
        $region47: #{layer_scale_init_block.5} parent=11 // pred_region
          _
        $region48: #{layer_scale_init_block.5} parent=11 // pred_fallthru
          _
      $region12: #{layer_scale_init_block.5} parent=5 // pred_fallthru
        _
      %p347 = scmp.lt.s32.totalorder %s20, 2
      // Predicated region
      $region49: #{layer_scale_init_block.5} parent=5 // pred_check
        %p348 = pneg %p347
      $region50: #{layer_scale_init_block.5} parent=5 // pred_check_branch
        %350 = sbr.rel (%p348) target = $region52
      $region51: #{layer_scale_init_block.5} parent=5 // pred_region
        // Predicated region
        $region53: #{layer_scale_init_block.5} parent=51 // pred_check
          %p351 = pneg %p54
        $region54: #{layer_scale_init_block.5} parent=51 // pred_check_branch
          %353 = sbr.rel (%p351) target = $region56
        $region55: #{layer_scale_init_block.5} parent=51 // pred_region
          %p354 = scmp.lt.s32.totalorder %s27, 1
          %s355 = scalar_select %p354, %s27, 1
          %p356 = scmp.lt.s32.totalorder %s28, 0
          %s357 = scalar_select %p356, %s28, 0
          %s358 = sadd.s32 %s357, %s355
          %s359 = smul.addr %s358, 8
          %s360 = scalar_lea.vmem %s0, %s359
        $region56: #{layer_scale_init_block.5} parent=51 // pred_fallthru
          _
        // Predicated region
        $region57: #{layer_scale_init_block.5} parent=51 // pred_check
          %p361 = pneg %p82
        $region58: #{layer_scale_init_block.5} parent=51 // pred_check_branch
          %363 = sbr.rel (%p361) target = $region60
        $region59: #{layer_scale_init_block.5} parent=51 // pred_region
          %p364 = scmp.lt.s32.totalorder %s27, 1
          %s365 = scalar_select %p364, %s27, 1
          %p366 = scmp.lt.s32.totalorder %s28, 0
          %s367 = scalar_select %p366, %s28, 0
          %s368 = sadd.s32 %s367, %s365
          %s369 = smul.addr %s368, 4
          %s370 = scalar_lea.vmem %s1, %s369
        $region60: #{layer_scale_init_block.5} parent=51 // pred_fallthru
          _
      $region52: #{layer_scale_init_block.5} parent=5 // pred_fallthru
        _
      %p371 = scmp.le.s32.totalorder 1, %s20
      %p372 = scmp.lt.s32.totalorder %s20, 3
      %p373 = pnand %p371, %p372
      %p374 = pneg %p373
      // Predicated region
      $region61: #{layer_scale_init_block.5} parent=5 // pred_check
        _
      $region62: #{layer_scale_init_block.5} parent=5 // pred_check_branch
        %376 = sbr.rel (%p373) target = $region64
      $region63: #{layer_scale_init_block.5} parent=5 // pred_region
        %s377 = ssub.s32 %s20, 1
        %p378 = scmp.lt.s32.totalorder %s29, 1
        %s379 = scalar_select %p378, %s29, 1
        %p380 = scmp.lt.s32.totalorder %s30, 0
        %s381 = scalar_select %p380, %s30, 0
        %s382 = sadd.s32 %s381, %s379
        %s383 = smul.addr %s382, 8
        %s384 = scalar_lea.vmem %s0, %s383
        %p385 = pneg %p60
        %p386 = pneg %p57
        %p387 = scmp.lt.s32.totalorder %s29, 1
        %s388 = scalar_select %p387, %s29, 1
        %p389 = scmp.lt.s32.totalorder %s30, 0
        %s390 = scalar_select %p389, %s30, 0
        %s391 = sadd.s32 %s390, %s388
        %s392 = smul.addr %s391, 4
        %s393 = scalar_lea.vmem %s1, %s392
        %p394 = pneg %p88
        %p395 = pneg %p85
        %p396 = pneg %p109
        %p397 = pneg %p106
        %p398 = pneg %p130
        %p399 = pneg %p127
        %p400 = pneg %p151
        %p401 = pneg %p148
        %p402 = pneg %p172
        %p403 = pneg %p169
        %p404 = pneg %p193
        %p405 = pneg %p190
        %p406 = pneg %p214
        %p407 = pneg %p211
        %p408 = pneg %p235
        %p409 = pneg %p232
        %p410 = pneg %p256
        %p411 = pneg %p253
        %p412 = pneg %p277
        %p413 = pneg %p274
        %p414 = pneg %p305
        %p415 = pneg %p302
        %s416 = sand.u32 %s292, 1
        %s417 = scalar_lea.sflag [#allocation3], %s416
        %s418 = sand.u32 %s292, 1
        %s419 = smul.addr %s418, 8
        %s420 = scalar_lea.vmem [#allocation2], %s419
        %p421 = scmp.lt.s32.totalorder %s29, 1
        %s422 = scalar_select %p421, %s29, 1
        %p423 = scmp.lt.s32.totalorder %s30, 0
        %s424 = scalar_select %p423, %s30, 0
        %s425 = sadd.s32 %s424, %s422
        %s426 = smul.addr %s425, 8
        %s427 = scalar_lea.vmem %s0, %s426
        %p428 = scmp.lt.s32.totalorder %s29, 1
        %s429 = scalar_select %p428, %s29, 1
        %p430 = scmp.lt.s32.totalorder %s30, 0
        %s431 = scalar_select %p430, %s30, 0
        %s432 = sadd.s32 %s431, %s429
        %s433 = smul.addr %s432, 4
        %s434 = scalar_lea.vmem %s1, %s433
        %v436 = vld [vmem:[%s434] sm:$0xf]
        %v437 = vld [vmem:[%s2] sm:$0xf]
        %v438 = vld [vmem:[%s2 + $0x4] sm:$0xf]
        %v439 = vld [vmem:[%s2 + $0x8] sm:$0xf]
        %v440 = vld [vmem:[%s2 + $0xc] sm:$0xf]
        %v445 = vunpack.c.l.b16 %v437
        %v446 = vunpack.c.l.b16 %v438
        %v447 = vunpack.c.l.b16 %v439
        %v448 = vunpack.c.l.b16 %v440
        %v449 = vpack.c.b16 %v446, %v445
        %v450 = vpack.c.b16 %v448, %v447
        %vm453 = vcmask 261120
        %v455 = vsel %vm453, %v436, 0
        %457 = vmatprep.subr.bf16.mxu0 0
        %458 = vmatpush1.bf16.msra.mxu0 0
        %459 = vmatprep.subr.bf16.mxu0 0
        %460 = vmatpush1.bf16.msra.mxu0 0
        %461 = vmatprep.subr.bf16.mxu0 0
        %462 = vmatpush1.bf16.msra.mxu0 0
        %463 = vmatprep.subr.bf16.mxu0 0
        %464 = vmatpush1.bf16.msra.mxu0 0
        %465 = vmatprep.subr.bf16.mxu0 0
        %466 = vmatpush1.bf16.msra.mxu0 0
        %467 = vmatprep.subr.bf16.mxu0 0
        %468 = vmatpush1.bf16.msra.mxu0 0
        %469 = vmatprep.subr.bf16.mxu0 0
        %470 = vmatpush1.bf16.msra.mxu0 %v450
        %471 = vmatprep.subr.bf16.mxu0 0
        %472 = vmatpush1.bf16.msra.mxu0 %v449
        %473 = vmatprep.subr.bf16.mxu0 0
        %474 = vmatpush2.bf16.msra.mxu0 0
        %475 = vmatprep.subr.bf16.mxu0 0
        %476 = vmatpush2.bf16.msra.mxu0 0
        %477 = vmatprep.subr.bf16.mxu0 0
        %478 = vmatpush2.bf16.msra.mxu0 0
        %479 = vmatprep.subr.bf16.mxu0 0
        %480 = vmatpush2.bf16.msra.mxu0 0
        %481 = vmatprep.subr.bf16.mxu0 0
        %482 = vmatpush2.bf16.msra.mxu0 0
        %483 = vmatprep.subr.bf16.mxu0 0
        %484 = vmatpush2.bf16.msra.mxu0 0
        %485 = vmatprep.subr.bf16.mxu0 0
        %486 = vmatpush2.bf16.msra.mxu0 0
        %487 = vmatprep.subr.bf16.mxu0 0
        %488 = vmatpush2.bf16.msra.mxu0 0
        %489 = vmatprep.mubr.bf16.mxu0 0
        %490 = vmatmul.mubr.bf16.gmra.mxu0 %v455
        %v491 = vpop.f32.mrf.mxu0
        %v492 = vadd.f32 0.0, %v491
        %v493 = vpop.f32.mrf.mxu0
        %v494 = vpop.f32.mrf.mxu0
        %v495 = vpop.f32.mrf.mxu0
        %496 = vdwg.mxu0
        %v497 = vld [vmem:[%s427] sm:$0xff]
        %v498 = vld [vmem:[%s3] sm:$0x1]
        %v500 = vlaneseq
        %v501 = vshrl.u32 %v500, 7
        %v502 = vsub.s32 0, %v501
        %v503 = vrot.slane %v498, %v502
        %v505 = vmul.f32 %v503, %v492
        %v506 = vadd.f32 %v497, %v505
        %v507 = vld [vmem:[%s4] sm:$0x1]
        %v508 = vld [vmem:[%s5] sm:$0x1]
        %v509 = vsel %vm453, %v506, 0.0
        %510 = vadd.xlane.f32.xlu0 %v509
        %v511 = vpop.xlane.xlu0 %510
        %v512 = vrcp.pop 32.0
        %v513 = vmul.f32 %v511, %v512
        %v514 = vsub.f32 %v506, %v513
        %v515 = vmul.f32 %v514, %v514
        %v516 = vsel %vm453, %v515, 0.0
        %517 = vadd.xlane.f32.xlu0 %v516
        %v518 = vpop.xlane.xlu0 %517
        %v519 = vmul.f32 %v518, %v512
        %v520 = vadd.f32 %v519, 1e-05
        %v521 = vrsqrt.pop %v520
        %v522 = vmul.f32 %v514, %v521
        %v524 = vlaneseq
        %v525 = vshrl.u32 %v524, 7
        %v526 = vsub.s32 0, %v525
        %v527 = vrot.slane %v507, %v526
        %v529 = vmul.f32 %v522, %v527
        %v531 = vlaneseq
        %v532 = vshrl.u32 %v531, 7
        %v533 = vsub.s32 0, %v532
        %v534 = vrot.slane %v508, %v533
        %v536 = vadd.f32 %v529, %v534
        %v537 = vpack.c.bf16 %v536, %v536
        %v538 = vld [vmem:[%s6] sm:$0xf]
        %v539 = vld [vmem:[%s6 + $0x4] sm:$0xf]
        %v540 = vld [vmem:[%s6 + $0x8] sm:$0xf]
        %v541 = vld [vmem:[%s6 + $0xc] sm:$0xf]
        %v542 = vld [vmem:[%s7] sm:$0x1]
        %v544 = vlaneseq
        %v545 = vshrl.u32 %v544, 7
        %v546 = vsub.s32 0, %v545
        %v547 = vrot.slane %v542, %v546
        %v553 = vunpack.c.l.b16 %v538
        %v554 = vunpack.c.l.b16 %v539
        %v555 = vunpack.c.l.b16 %v540
        %v556 = vunpack.c.l.b16 %v541
        %v557 = vpack.c.b16 %v554, %v553
        %v558 = vpack.c.b16 %v556, %v555
        %v562 = vsel %vm453, %v537, 0
        %564 = vmatprep.subr.bf16.mxu0 0
        %565 = vmatpush1.bf16.msra.mxu0 0
        %566 = vmatprep.subr.bf16.mxu0 0
        %567 = vmatpush1.bf16.msra.mxu0 0
        %568 = vmatprep.subr.bf16.mxu0 0
        %569 = vmatpush1.bf16.msra.mxu0 0
        %570 = vmatprep.subr.bf16.mxu0 0
        %571 = vmatpush1.bf16.msra.mxu0 0
        %572 = vmatprep.subr.bf16.mxu0 0
        %573 = vmatpush1.bf16.msra.mxu0 0
        %574 = vmatprep.subr.bf16.mxu0 0
        %575 = vmatpush1.bf16.msra.mxu0 0
        %576 = vmatprep.subr.bf16.mxu0 0
        %577 = vmatpush1.bf16.msra.mxu0 %v558
        %578 = vmatprep.subr.bf16.mxu0 0
        %579 = vmatpush1.bf16.msra.mxu0 %v557
        %580 = vmatprep.subr.bf16.mxu0 0
        %581 = vmatpush2.bf16.msra.mxu0 0
        %582 = vmatprep.subr.bf16.mxu0 0
        %583 = vmatpush2.bf16.msra.mxu0 0
        %584 = vmatprep.subr.bf16.mxu0 0
        %585 = vmatpush2.bf16.msra.mxu0 0
        %586 = vmatprep.subr.bf16.mxu0 0
        %587 = vmatpush2.bf16.msra.mxu0 0
        %588 = vmatprep.subr.bf16.mxu0 0
        %589 = vmatpush2.bf16.msra.mxu0 0
        %590 = vmatprep.subr.bf16.mxu0 0
        %591 = vmatpush2.bf16.msra.mxu0 0
        %592 = vmatprep.subr.bf16.mxu0 0
        %593 = vmatpush2.bf16.msra.mxu0 0
        %594 = vmatprep.subr.bf16.mxu0 0
        %595 = vmatpush2.bf16.msra.mxu0 0
        %596 = vmatprep.mubr.bf16.mxu0 0
        %597 = vmatmul.mubr.bf16.gmra.mxu0 %v562
        %v598 = vpop.f32.mrf.mxu0
        %v599 = vadd.f32 %v547, %v598
        %v600 = vpop.f32.mrf.mxu0
        %v601 = vpop.f32.mrf.mxu0
        %v602 = vpop.f32.mrf.mxu0
        %603 = vdwg.mxu0
        %v604 = vmul.f32 %v599, 0.5
        %v605 = vmul.f32 %v599, 0.70710677
        %v606 = verf.f32.pop %v605
        %v607 = vadd.f32 %v606, 1.0
        %v608 = vmul.f32 %v604, %v607
        %v609 = vpack.c.bf16 %v608, %v608
        %v610 = vld [vmem:[%s8] sm:$0xf]
        %v611 = vld [vmem:[%s8 + $0x4] sm:$0xf]
        %v612 = vld [vmem:[%s8 + $0x8] sm:$0xf]
        %v613 = vld [vmem:[%s8 + $0xc] sm:$0xf]
        %v614 = vld [vmem:[%s8 + $0x10] sm:$0xf]
        %v615 = vld [vmem:[%s8 + $0x14] sm:$0xf]
        %v616 = vld [vmem:[%s8 + $0x18] sm:$0xf]
        %v617 = vld [vmem:[%s8 + $0x1c] sm:$0xf]
        %v618 = vld [vmem:[%s8 + $0x20] sm:$0xf]
        %v619 = vld [vmem:[%s8 + $0x24] sm:$0xf]
        %v620 = vld [vmem:[%s8 + $0x28] sm:$0xf]
        %v621 = vld [vmem:[%s8 + $0x2c] sm:$0xf]
        %v622 = vld [vmem:[%s8 + $0x30] sm:$0xf]
        %v623 = vld [vmem:[%s8 + $0x34] sm:$0xf]
        %v624 = vld [vmem:[%s8 + $0x38] sm:$0xf]
        %v625 = vld [vmem:[%s8 + $0x3c] sm:$0xf]
        %v626 = vld [vmem:[%s9] sm:$0x1]
        %v628 = vlaneseq
        %v629 = vshrl.u32 %v628, 7
        %v630 = vsub.s32 0, %v629
        %v631 = vrot.slane %v626, %v630
        %v649 = vunpack.c.l.b16 %v610
        %v650 = vunpack.c.l.b16 %v611
        %v651 = vunpack.c.l.b16 %v612
        %v652 = vunpack.c.l.b16 %v613
        %v653 = vunpack.c.l.b16 %v614
        %v654 = vunpack.c.l.b16 %v615
        %v655 = vunpack.c.l.b16 %v616
        %v656 = vunpack.c.l.b16 %v617
        %v657 = vunpack.c.l.b16 %v618
        %v658 = vunpack.c.l.b16 %v619
        %v659 = vunpack.c.l.b16 %v620
        %v660 = vunpack.c.l.b16 %v621
        %v661 = vunpack.c.l.b16 %v622
        %v662 = vunpack.c.l.b16 %v623
        %v663 = vunpack.c.l.b16 %v624
        %v664 = vunpack.c.l.b16 %v625
        %v665 = vpack.c.b16 %v650, %v649
        %v666 = vpack.c.b16 %v652, %v651
        %v667 = vpack.c.b16 %v654, %v653
        %v668 = vpack.c.b16 %v656, %v655
        %v669 = vpack.c.b16 %v658, %v657
        %v670 = vpack.c.b16 %v660, %v659
        %v671 = vpack.c.b16 %v662, %v661
        %v672 = vpack.c.b16 %v664, %v663
        %681 = vmatprep.subr.bf16.mxu0 0
        %682 = vmatpush1.bf16.msra.mxu0 %v672
        %683 = vmatprep.subr.bf16.mxu0 0
        %684 = vmatpush1.bf16.msra.mxu0 %v671
        %685 = vmatprep.subr.bf16.mxu0 0
        %686 = vmatpush1.bf16.msra.mxu0 %v670
        %687 = vmatprep.subr.bf16.mxu0 0
        %688 = vmatpush1.bf16.msra.mxu0 %v669
        %689 = vmatprep.subr.bf16.mxu0 0
        %690 = vmatpush1.bf16.msra.mxu0 %v668
        %691 = vmatprep.subr.bf16.mxu0 0
        %692 = vmatpush1.bf16.msra.mxu0 %v667
        %693 = vmatprep.subr.bf16.mxu0 0
        %694 = vmatpush1.bf16.msra.mxu0 %v666
        %695 = vmatprep.subr.bf16.mxu0 0
        %696 = vmatpush1.bf16.msra.mxu0 %v665
        %697 = vmatprep.subr.bf16.mxu0 0
        %698 = vmatpush2.bf16.msra.mxu0 0
        %699 = vmatprep.subr.bf16.mxu0 0
        %700 = vmatpush2.bf16.msra.mxu0 0
        %701 = vmatprep.subr.bf16.mxu0 0
        %702 = vmatpush2.bf16.msra.mxu0 0
        %703 = vmatprep.subr.bf16.mxu0 0
        %704 = vmatpush2.bf16.msra.mxu0 0
        %705 = vmatprep.subr.bf16.mxu0 0
        %706 = vmatpush2.bf16.msra.mxu0 0
        %707 = vmatprep.subr.bf16.mxu0 0
        %708 = vmatpush2.bf16.msra.mxu0 0
        %709 = vmatprep.subr.bf16.mxu0 0
        %710 = vmatpush2.bf16.msra.mxu0 0
        %711 = vmatprep.subr.bf16.mxu0 0
        %712 = vmatpush2.bf16.msra.mxu0 0
        %713 = vmatprep.mubr.bf16.mxu0 0
        %714 = vmatmul.mubr.bf16.gmra.mxu0 %v609
        %v715 = vpop.f32.mrf.mxu0
        %v716 = vadd.f32 %v631, %v715
        %v717 = vpop.f32.mrf.mxu0
        %v718 = vpop.f32.mrf.mxu0
        %v719 = vpop.f32.mrf.mxu0
        %720 = vdwg.mxu0
        %v721 = vld [vmem:[%s10] sm:$0x1]
        %v723 = vlaneseq
        %v724 = vshrl.u32 %v723, 7
        %v725 = vsub.s32 0, %v724
        %v726 = vrot.slane %v721, %v725
        %v728 = vmul.f32 %v726, %v716
        %v729 = vadd.f32 %v506, %v728
        %730 = vst.msk [vmem:[%s420] sm:$0xff] %vm453, %v729
        %s731 = sand.u32 %s292, 1
        %s732 = scalar_lea.sflag [#allocation3], %s731
        %s733 = sand.u32 %s292, 1
        %s734 = smul.addr %s733, 8
        %s735 = scalar_lea.vmem [#allocation2], %s734
        // Predicated region
        $region65: #{layer_scale_init_block.5} parent=63 // pred_check
          %p736 = pneg %p302
        $region66: #{layer_scale_init_block.5} parent=63 // pred_check_branch
          %738 = sbr.rel (%p736) target = $region68
        $region67: #{layer_scale_init_block.5} parent=63 // pred_region
          %s740 = ssub.s32 128, 128
          %741 = vsyncadd %s732, %s740
          %s742 = sadd.s32 %s30, %s29
          %s743 = smul.addr %s742, 128
          %s744 = scalar_lea.hbm %s11, %s743
          %s746 = sshll.u32 %s735, 4
          %s747 = int_to_ptr.vmem [resolvable:$true] %s746
          %749 = dma.vmem_to_hbm [thread:$0]  %s747, 128, %s744, %s732
        $region68: #{layer_scale_init_block.5} parent=63 // pred_fallthru
          _
      $region64: #{layer_scale_init_block.5} parent=5 // pred_fallthru
        _
      %p750 = scmp.le.s32.totalorder 2, %s20
      // Predicated region
      $region69: #{layer_scale_init_block.5} parent=5 // pred_check
        %p751 = pneg %p750
      $region70: #{layer_scale_init_block.5} parent=5 // pred_check_branch
        %753 = sbr.rel (%p751) target = $region72
      $region71: #{layer_scale_init_block.5} parent=5 // pred_region
        %s754 = ssub.s32 %s20, 2
        // Predicated region
        $region73: #{layer_scale_init_block.5} parent=71 // pred_check
          %p755 = pneg %p308
        $region74: #{layer_scale_init_block.5} parent=71 // pred_check_branch
          %757 = sbr.rel (%p755) target = $region76
        $region75: #{layer_scale_init_block.5} parent=71 // pred_region
          %s758 = sand.u32 %s293, 1
          %s759 = scalar_lea.sflag [#allocation3], %s758
          %s760 = sand.u32 %s293, 1
          %s761 = smul.addr %s760, 8
          %s762 = scalar_lea.vmem [#allocation2], %s761
          %763 = dma.done %s759, 128
        $region76: #{layer_scale_init_block.5} parent=71 // pred_fallthru
          _
      $region72: #{layer_scale_init_block.5} parent=5 // pred_fallthru
        _
    $region6: #{layer_scale_init_block.5} parent=1 // loop_footer
      %s24 = sadd.s32 1, %s20
    $region7: #{layer_scale_init_block.5} parent=1 // loop_footer_branch
      %19 = sbr.rel target = $region3
    $region8: #{layer_scale_init_block.5} parent=1 // loop_exit
      _
    %764 = vsyncpa [#allocation3], 1
    %s765 = scalar_lea.sflag [#allocation3], 1
    %766 = vsyncpa %s765, 1

// kernel: layer_scale_init_block.4
$region0: #{layer_scale_init_block.4}
  #allocation0 [shape = 'u32[]', space=smem, size = 0x4, offset = 0x4, fixed_abs, tag = 'smem constant byte address 0x4 - core index']
  #allocation1 [shape = 'u32[144,128]{1,0:T(1,128)}', space=vmem, size = 0x12000, scoped, tag = 'internal scratch']
  %s0 = inlined_call_operand.vmem [shape: bf16[2,4,8,8], index: 0, kind: input, shape index: {}]
  %s1 = inlined_call_operand.vmem [shape: bf16[2,4,8,8], index: 1, kind: input, shape index: {}]
  %s2 = inlined_call_operand.vmem [shape: bf16[2,4,8,8], index: 2, kind: input, shape index: {}]
  %s3 = inlined_call_operand.vmem [shape: bf16[2,4,8,8], index: 3, kind: output, shape index: {}]
  %s4 = sld [smem:[#allocation0]]
  $region45: #{layer_scale_init_block.4} parent=0
    _
  %s6 = ssub.s32 1, %s4
  %s7 = scalar_select 0, %s6, %s4
  loop: start=0, step=1, limit=4
  $region2: #{layer_scale_init_block.4} parent=0 // loop_pre_header
    _
  $region3: #{layer_scale_init_block.4} parent=0 // loop_header
    %s9 = sphi 0, %s13
    %p10 = scmp.ge.s32.totalorder %s9, 4
    %s16 = sphi 0, %s28
    %s17 = sphi 0, %s24
    %s18 = sphi 0, %s16
    %s19 = sphi 0, %s17
    %s20 = sphi 0, %s18
    %s21 = sphi 0, %s19
    %s33 = sphi 0, %s35
    %s36 = sphi 0, %s33
    %s37 = sphi 0, %s36
    %s53 = sphi 0, %s37
    %s59 = sphi 0, %s61
    %s62 = sphi 0, %s59
    %s63 = sphi 0, %s62
    %s79 = sphi 0, %s63
    %s85 = sphi 0, %s87
    %s88 = sphi 0, %s85
    %s89 = sphi 0, %s88
    %s105 = sphi 0, %s89
    %s113 = sphi 0, %s115
    %s116 = sphi 0, %s113
    %s117 = sphi 0, %s116
    %s133 = sphi 0, %s117
  $region4: #{layer_scale_init_block.4} parent=0 // loop_header_branch
    %12 = sbr.rel (%p10) target = $region8
  $region5: #{layer_scale_init_block.4} parent=0 // loop_body
    %s14 = ssub.s32 %s9, 1
    %s15 = ssub.s32 %s9, 2
    %s22 = sadd.s32 1, %s17
    %p23 = scmp.ge.s32.totalorder %s22, 1
    %s24 = scalar_select %p23, 0, %s22
    %s25 = sadd.s32 1, %s16
    %s26 = scalar_select %p23, %s25, %s16
    %p27 = scmp.ge.s32.totalorder %s26, 2
    %s28 = scalar_select %p27, 0, %s26
    %s29 = ssub.s32 %s16, %s28
    %s30 = ssub.s32 %s17, %s24
    %s31 = sor.u32 %s29, %s30
    %p32 = scmp.eq.s32.totalorder %s31, 0
    %s34 = sadd.s32 %s33, 1
    %s35 = scalar_select %p32, %s33, %s34
    %p38 = pneg %p32
    %p39 = scmp.eq.s32.totalorder %s9, 1
    %p40 = por %p38, %p39
    %p41 = scmp.ne.s32.totalorder %s33, %s36
    %p42 = scmp.eq.s32.totalorder %s9, 0
    %p43 = por %p41, %p42
    %p44 = scmp.ne.s32.totalorder %s33, %s36
    %p45 = scmp.eq.s32.totalorder %s14, 1
    %p46 = por %p44, %p45
    %p47 = scmp.ne.s32.totalorder %s36, %s37
    %p48 = scmp.eq.s32.totalorder %s14, 0
    %p49 = por %p47, %p48
    %p50 = scmp.ne.s32.totalorder %s36, %s37
    %p51 = scmp.eq.s32.totalorder %s15, 1
    %p52 = por %p50, %p51
    %p54 = scmp.ne.s32.totalorder %s37, %s53
    %p55 = scmp.eq.s32.totalorder %s15, 0
    %p56 = por %p54, %p55
    %s57 = ssub.s32 %s16, %s28
    %p58 = scmp.eq.s32.totalorder %s57, 0
    %s60 = sadd.s32 %s59, 1
    %s61 = scalar_select %p58, %s59, %s60
    %p64 = pneg %p58
    %p65 = scmp.eq.s32.totalorder %s9, 1
    %p66 = por %p64, %p65
    %p67 = scmp.ne.s32.totalorder %s59, %s62
    %p68 = scmp.eq.s32.totalorder %s9, 0
    %p69 = por %p67, %p68
    %p70 = scmp.ne.s32.totalorder %s59, %s62
    %p71 = scmp.eq.s32.totalorder %s14, 1
    %p72 = por %p70, %p71
    %p73 = scmp.ne.s32.totalorder %s62, %s63
    %p74 = scmp.eq.s32.totalorder %s14, 0
    %p75 = por %p73, %p74
    %p76 = scmp.ne.s32.totalorder %s62, %s63
    %p77 = scmp.eq.s32.totalorder %s15, 1
    %p78 = por %p76, %p77
    %p80 = scmp.ne.s32.totalorder %s63, %s79
    %p81 = scmp.eq.s32.totalorder %s15, 0
    %p82 = por %p80, %p81
    %s83 = ssub.s32 %s16, %s28
    %p84 = scmp.eq.s32.totalorder %s83, 0
    %s86 = sadd.s32 %s85, 1
    %s87 = scalar_select %p84, %s85, %s86
    %p90 = pneg %p84
    %p91 = scmp.eq.s32.totalorder %s9, 1
    %p92 = por %p90, %p91
    %p93 = scmp.ne.s32.totalorder %s85, %s88
    %p94 = scmp.eq.s32.totalorder %s9, 0
    %p95 = por %p93, %p94
    %p96 = scmp.ne.s32.totalorder %s85, %s88
    %p97 = scmp.eq.s32.totalorder %s14, 1
    %p98 = por %p96, %p97
    %p99 = scmp.ne.s32.totalorder %s88, %s89
    %p100 = scmp.eq.s32.totalorder %s14, 0
    %p101 = por %p99, %p100
    %p102 = scmp.ne.s32.totalorder %s88, %s89
    %p103 = scmp.eq.s32.totalorder %s15, 1
    %p104 = por %p102, %p103
    %p106 = scmp.ne.s32.totalorder %s89, %s105
    %p107 = scmp.eq.s32.totalorder %s15, 0
    %p108 = por %p106, %p107
    %s109 = ssub.s32 %s16, %s28
    %s110 = ssub.s32 %s17, %s24
    %s111 = sor.u32 %s109, %s110
    %p112 = scmp.eq.s32.totalorder %s111, 0
    %s114 = sadd.s32 %s113, 1
    %s115 = scalar_select %p112, %s113, %s114
    %p118 = pneg %p112
    %p119 = scmp.eq.s32.totalorder %s9, 1
    %p120 = por %p118, %p119
    %p121 = scmp.ne.s32.totalorder %s113, %s116
    %p122 = scmp.eq.s32.totalorder %s9, 0
    %p123 = por %p121, %p122
    %p124 = scmp.ne.s32.totalorder %s113, %s116
    %p125 = scmp.eq.s32.totalorder %s14, 1
    %p126 = por %p124, %p125
    %p127 = scmp.ne.s32.totalorder %s116, %s117
    %p128 = scmp.eq.s32.totalorder %s14, 0
    %p129 = por %p127, %p128
    %p130 = scmp.ne.s32.totalorder %s116, %s117
    %p131 = scmp.eq.s32.totalorder %s15, 1
    %p132 = por %p130, %p131
    %p134 = scmp.ne.s32.totalorder %s117, %s133
    %p135 = scmp.eq.s32.totalorder %s15, 0
    %p136 = por %p134, %p135
    %p137 = scmp.le.s32.totalorder 1, %s9
    %p138 = scmp.lt.s32.totalorder %s9, 3
    %p139 = pnand %p137, %p138
    %p140 = pneg %p139
    // Predicated region
    $region9: #{layer_scale_init_block.4} parent=5 // pred_check
      _
    $region10: #{layer_scale_init_block.4} parent=5 // pred_check_branch
      %142 = sbr.rel (%p139) target = $region12
    $region11: #{layer_scale_init_block.4} parent=5 // pred_region
      %s143 = ssub.s32 %s9, 1
    $region12: #{layer_scale_init_block.4} parent=5 // pred_fallthru
      _
    %p144 = scmp.lt.s32.totalorder %s9, 2
    // Predicated region
    $region13: #{layer_scale_init_block.4} parent=5 // pred_check
      %p145 = pneg %p144
    $region14: #{layer_scale_init_block.4} parent=5 // pred_check_branch
      %147 = sbr.rel (%p145) target = $region16
    $region15: #{layer_scale_init_block.4} parent=5 // pred_region
      // Predicated region
      $region17: #{layer_scale_init_block.4} parent=15 // pred_check
        %p148 = pneg %p43
      $region18: #{layer_scale_init_block.4} parent=15 // pred_check_branch
        %150 = sbr.rel (%p148) target = $region20
      $region19: #{layer_scale_init_block.4} parent=15 // pred_region
        %p151 = scmp.lt.s32.totalorder %s16, 1
        %s152 = scalar_select %p151, %s16, 1
        %p153 = scmp.lt.s32.totalorder %s17, 0
        %s154 = scalar_select %p153, %s17, 0
        %s155 = smul.addr %s152, 4
        %s156 = sadd.s32 %s154, %s155
        %s157 = smul.addr %s156, 4
        %s158 = scalar_lea.vmem %s0, %s157
      $region20: #{layer_scale_init_block.4} parent=15 // pred_fallthru
        _
      // Predicated region
      $region21: #{layer_scale_init_block.4} parent=15 // pred_check
        %p159 = pneg %p69
      $region22: #{layer_scale_init_block.4} parent=15 // pred_check_branch
        %161 = sbr.rel (%p159) target = $region24
      $region23: #{layer_scale_init_block.4} parent=15 // pred_region
        %p162 = scmp.lt.s32.totalorder %s16, 1
        %s163 = scalar_select %p162, %s16, 1
        %s164 = smul.addr %s163, 4
        %s165 = smul.addr %s164, 4
        %s166 = scalar_lea.vmem %s1, %s165
      $region24: #{layer_scale_init_block.4} parent=15 // pred_fallthru
        _
      // Predicated region
      $region25: #{layer_scale_init_block.4} parent=15 // pred_check
        %p167 = pneg %p95
      $region26: #{layer_scale_init_block.4} parent=15 // pred_check_branch
        %169 = sbr.rel (%p167) target = $region28
      $region27: #{layer_scale_init_block.4} parent=15 // pred_region
        %p170 = scmp.lt.s32.totalorder %s16, 1
        %s171 = scalar_select %p170, %s16, 1
        %s172 = smul.addr %s171, 4
        %s173 = smul.addr %s172, 4
        %s174 = scalar_lea.vmem %s2, %s173
      $region28: #{layer_scale_init_block.4} parent=15 // pred_fallthru
        _
    $region16: #{layer_scale_init_block.4} parent=5 // pred_fallthru
      _
    %p175 = scmp.le.s32.totalorder 1, %s9
    %p176 = scmp.lt.s32.totalorder %s9, 3
    %p177 = pnand %p175, %p176
    %p178 = pneg %p177
    // Predicated region
    $region29: #{layer_scale_init_block.4} parent=5 // pred_check
      _
    $region30: #{layer_scale_init_block.4} parent=5 // pred_check_branch
      %180 = sbr.rel (%p177) target = $region32
    $region31: #{layer_scale_init_block.4} parent=5 // pred_region
      %s181 = ssub.s32 %s9, 1
      %p182 = scmp.lt.s32.totalorder %s18, 1
      %s183 = scalar_select %p182, %s18, 1
      %p184 = scmp.lt.s32.totalorder %s19, 0
      %s185 = scalar_select %p184, %s19, 0
      %s186 = smul.addr %s183, 4
      %s187 = sadd.s32 %s185, %s186
      %s188 = smul.addr %s187, 4
      %s189 = scalar_lea.vmem %s0, %s188
      %p190 = pneg %p49
      %p191 = pneg %p46
      %p192 = scmp.lt.s32.totalorder %s18, 1
      %s193 = scalar_select %p192, %s18, 1
      %s194 = smul.addr %s193, 4
      %s195 = smul.addr %s194, 4
      %s196 = scalar_lea.vmem %s1, %s195
      %p197 = pneg %p75
      %p198 = pneg %p72
      %p199 = scmp.lt.s32.totalorder %s18, 1
      %s200 = scalar_select %p199, %s18, 1
      %s201 = smul.addr %s200, 4
      %s202 = smul.addr %s201, 4
      %s203 = scalar_lea.vmem %s2, %s202
      %p204 = pneg %p101
      %p205 = pneg %p98
      %p206 = pneg %p129
      %p207 = pneg %p126
      %p208 = scmp.lt.s32.totalorder %s18, 1
      %s209 = scalar_select %p208, %s18, 1
      %p210 = scmp.lt.s32.totalorder %s19, 0
      %s211 = scalar_select %p210, %s19, 0
      %s212 = smul.addr %s209, 4
      %s213 = sadd.s32 %s211, %s212
      %s214 = smul.addr %s213, 4
      %s215 = scalar_lea.vmem %s3, %s214
      %p216 = scmp.lt.s32.totalorder %s18, 1
      %s217 = scalar_select %p216, %s18, 1
      %p218 = scmp.lt.s32.totalorder %s19, 0
      %s219 = scalar_select %p218, %s19, 0
      %s220 = smul.addr %s217, 4
      %s221 = sadd.s32 %s219, %s220
      %s222 = smul.addr %s221, 4
      %s223 = scalar_lea.vmem %s0, %s222
      %p224 = scmp.lt.s32.totalorder %s18, 1
      %s225 = scalar_select %p224, %s18, 1
      %s226 = smul.addr %s225, 4
      %s227 = smul.addr %s226, 4
      %s228 = scalar_lea.vmem %s1, %s227
      %p229 = scmp.lt.s32.totalorder %s18, 1
      %s230 = scalar_select %p229, %s18, 1
      %s231 = smul.addr %s230, 4
      %s232 = smul.addr %s231, 4
      %s233 = scalar_lea.vmem %s2, %s232
      %p234 = scmp.lt.s32.totalorder %s18, 1
      %s235 = scalar_select %p234, %s18, 1
      %p236 = scmp.lt.s32.totalorder %s19, 0
      %s237 = scalar_select %p236, %s19, 0
      %s238 = smul.addr %s235, 4
      %s239 = sadd.s32 %s237, %s238
      %s240 = smul.addr %s239, 4
      %s241 = scalar_lea.vmem %s3, %s240
      %v243 = vld [vmem:[%s223] sm:$0xf]
      %v244 = vld [vmem:[%s223 + $0x4] sm:$0xf]
      %v245 = vld [vmem:[%s223 + $0x8] sm:$0xf]
      %v246 = vld [vmem:[%s223 + $0xc] sm:$0xf]
      %v247 = vld [vmem:[%s228] sm:$0xf]
      %v248 = vld [vmem:[%s228 + $0x4] sm:$0xf]
      %v249 = vld [vmem:[%s228 + $0x8] sm:$0xf]
      %v250 = vld [vmem:[%s228 + $0xc] sm:$0xf]
      %v251 = vld [vmem:[%s233] sm:$0xf]
      %v252 = vld [vmem:[%s233 + $0x4] sm:$0xf]
      %v253 = vld [vmem:[%s233 + $0x8] sm:$0xf]
      %v254 = vld [vmem:[%s233 + $0xc] sm:$0xf]
      %vm255 = vcmask 64512
      %v257 = vsel %vm255, %v243, 0
      %v260 = vsel %vm255, %v247, 0
      %262 = vmatprep.subr.bf16.mxu0 0
      %263 = vmatpush1.bf16.xpose.msra.mxu0 0
      %264 = vmatprep.subr.bf16.mxu0 0
      %265 = vmatpush1.bf16.xpose.msra.mxu0 0
      %266 = vmatprep.subr.bf16.mxu0 0
      %267 = vmatpush1.bf16.xpose.msra.mxu0 0
      %268 = vmatprep.subr.bf16.mxu0 0
      %269 = vmatpush1.bf16.xpose.msra.mxu0 0
      %270 = vmatprep.subr.bf16.mxu0 0
      %271 = vmatpush1.bf16.xpose.msra.mxu0 0
      %272 = vmatprep.subr.bf16.mxu0 0
      %273 = vmatpush1.bf16.xpose.msra.mxu0 0
      %274 = vmatprep.subr.bf16.mxu0 0
      %275 = vmatpush1.bf16.xpose.msra.mxu0 0
      %276 = vmatprep.subr.bf16.mxu0 0
      %277 = vmatpush1.bf16.xpose.msra.mxu0 %v260
      %278 = vmatprep.subr.bf16.mxu0 0
      %279 = vmatpush2.bf16.xpose.msra.mxu0 0
      %280 = vmatprep.subr.bf16.mxu0 0
      %281 = vmatpush2.bf16.xpose.msra.mxu0 0
      %282 = vmatprep.subr.bf16.mxu0 0
      %283 = vmatpush2.bf16.xpose.msra.mxu0 0
      %284 = vmatprep.subr.bf16.mxu0 0
      %285 = vmatpush2.bf16.xpose.msra.mxu0 0
      %286 = vmatprep.subr.bf16.mxu0 0
      %287 = vmatpush2.bf16.xpose.msra.mxu0 0
      %288 = vmatprep.subr.bf16.mxu0 0
      %289 = vmatpush2.bf16.xpose.msra.mxu0 0
      %290 = vmatprep.subr.bf16.mxu0 0
      %291 = vmatpush2.bf16.xpose.msra.mxu0 0
      %292 = vmatprep.subr.bf16.mxu0 0
      %293 = vmatpush2.bf16.xpose.msra.mxu0 0
      %294 = vmatprep.mubr.bf16.mxu0 0
      %295 = vmatmul.mubr.bf16.gmra.mxu0 %v257
      %v296 = vpop.f32.mrf.mxu0
      %v297 = vadd.f32 0.0, %v296
      %v298 = vpop.f32.mrf.mxu0
      %v299 = vpop.f32.mrf.mxu0
      %v300 = vpop.f32.mrf.mxu0
      %301 = vdwg.mxu0
      %v303 = vsel %vm255, %v244, 0
      %v306 = vsel %vm255, %v248, 0
      %308 = vmatprep.subr.bf16.mxu0 0
      %309 = vmatpush1.bf16.xpose.msra.mxu0 0
      %310 = vmatprep.subr.bf16.mxu0 0
      %311 = vmatpush1.bf16.xpose.msra.mxu0 0
      %312 = vmatprep.subr.bf16.mxu0 0
      %313 = vmatpush1.bf16.xpose.msra.mxu0 0
      %314 = vmatprep.subr.bf16.mxu0 0
      %315 = vmatpush1.bf16.xpose.msra.mxu0 0
      %316 = vmatprep.subr.bf16.mxu0 0
      %317 = vmatpush1.bf16.xpose.msra.mxu0 0
      %318 = vmatprep.subr.bf16.mxu0 0
      %319 = vmatpush1.bf16.xpose.msra.mxu0 0
      %320 = vmatprep.subr.bf16.mxu0 0
      %321 = vmatpush1.bf16.xpose.msra.mxu0 0
      %322 = vmatprep.subr.bf16.mxu0 0
      %323 = vmatpush1.bf16.xpose.msra.mxu0 %v306
      %324 = vmatprep.subr.bf16.mxu0 0
      %325 = vmatpush2.bf16.xpose.msra.mxu0 0
      %326 = vmatprep.subr.bf16.mxu0 0
      %327 = vmatpush2.bf16.xpose.msra.mxu0 0
      %328 = vmatprep.subr.bf16.mxu0 0
      %329 = vmatpush2.bf16.xpose.msra.mxu0 0
      %330 = vmatprep.subr.bf16.mxu0 0
      %331 = vmatpush2.bf16.xpose.msra.mxu0 0
      %332 = vmatprep.subr.bf16.mxu0 0
      %333 = vmatpush2.bf16.xpose.msra.mxu0 0
      %334 = vmatprep.subr.bf16.mxu0 0
      %335 = vmatpush2.bf16.xpose.msra.mxu0 0
      %336 = vmatprep.subr.bf16.mxu0 0
      %337 = vmatpush2.bf16.xpose.msra.mxu0 0
      %338 = vmatprep.subr.bf16.mxu0 0
      %339 = vmatpush2.bf16.xpose.msra.mxu0 0
      %340 = vmatprep.mubr.bf16.mxu0 0
      %341 = vmatmul.mubr.bf16.gmra.mxu0 %v303
      %v342 = vpop.f32.mrf.mxu0
      %v343 = vadd.f32 0.0, %v342
      %v344 = vpop.f32.mrf.mxu0
      %v345 = vpop.f32.mrf.mxu0
      %v346 = vpop.f32.mrf.mxu0
      %347 = vdwg.mxu0
      %v349 = vsel %vm255, %v245, 0
      %v352 = vsel %vm255, %v249, 0
      %354 = vmatprep.subr.bf16.mxu0 0
      %355 = vmatpush1.bf16.xpose.msra.mxu0 0
      %356 = vmatprep.subr.bf16.mxu0 0
      %357 = vmatpush1.bf16.xpose.msra.mxu0 0
      %358 = vmatprep.subr.bf16.mxu0 0
      %359 = vmatpush1.bf16.xpose.msra.mxu0 0
      %360 = vmatprep.subr.bf16.mxu0 0
      %361 = vmatpush1.bf16.xpose.msra.mxu0 0
      %362 = vmatprep.subr.bf16.mxu0 0
      %363 = vmatpush1.bf16.xpose.msra.mxu0 0
      %364 = vmatprep.subr.bf16.mxu0 0
      %365 = vmatpush1.bf16.xpose.msra.mxu0 0
      %366 = vmatprep.subr.bf16.mxu0 0
      %367 = vmatpush1.bf16.xpose.msra.mxu0 0
      %368 = vmatprep.subr.bf16.mxu0 0
      %369 = vmatpush1.bf16.xpose.msra.mxu0 %v352
      %370 = vmatprep.subr.bf16.mxu0 0
      %371 = vmatpush2.bf16.xpose.msra.mxu0 0
      %372 = vmatprep.subr.bf16.mxu0 0
      %373 = vmatpush2.bf16.xpose.msra.mxu0 0
      %374 = vmatprep.subr.bf16.mxu0 0
      %375 = vmatpush2.bf16.xpose.msra.mxu0 0
      %376 = vmatprep.subr.bf16.mxu0 0
      %377 = vmatpush2.bf16.xpose.msra.mxu0 0
      %378 = vmatprep.subr.bf16.mxu0 0
      %379 = vmatpush2.bf16.xpose.msra.mxu0 0
      %380 = vmatprep.subr.bf16.mxu0 0
      %381 = vmatpush2.bf16.xpose.msra.mxu0 0
      %382 = vmatprep.subr.bf16.mxu0 0
      %383 = vmatpush2.bf16.xpose.msra.mxu0 0
      %384 = vmatprep.subr.bf16.mxu0 0
      %385 = vmatpush2.bf16.xpose.msra.mxu0 0
      %386 = vmatprep.mubr.bf16.mxu0 0
      %387 = vmatmul.mubr.bf16.gmra.mxu0 %v349
      %v388 = vpop.f32.mrf.mxu0
      %v389 = vadd.f32 0.0, %v388
      %v390 = vpop.f32.mrf.mxu0
      %v391 = vpop.f32.mrf.mxu0
      %v392 = vpop.f32.mrf.mxu0
      %393 = vdwg.mxu0
      %v395 = vsel %vm255, %v246, 0
      %v398 = vsel %vm255, %v250, 0
      %400 = vmatprep.subr.bf16.mxu0 0
      %401 = vmatpush1.bf16.xpose.msra.mxu0 0
      %402 = vmatprep.subr.bf16.mxu0 0
      %403 = vmatpush1.bf16.xpose.msra.mxu0 0
      %404 = vmatprep.subr.bf16.mxu0 0
      %405 = vmatpush1.bf16.xpose.msra.mxu0 0
      %406 = vmatprep.subr.bf16.mxu0 0
      %407 = vmatpush1.bf16.xpose.msra.mxu0 0
      %408 = vmatprep.subr.bf16.mxu0 0
      %409 = vmatpush1.bf16.xpose.msra.mxu0 0
      %410 = vmatprep.subr.bf16.mxu0 0
      %411 = vmatpush1.bf16.xpose.msra.mxu0 0
      %412 = vmatprep.subr.bf16.mxu0 0
      %413 = vmatpush1.bf16.xpose.msra.mxu0 0
      %414 = vmatprep.subr.bf16.mxu0 0
      %415 = vmatpush1.bf16.xpose.msra.mxu0 %v398
      %416 = vmatprep.subr.bf16.mxu0 0
      %417 = vmatpush2.bf16.xpose.msra.mxu0 0
      %418 = vmatprep.subr.bf16.mxu0 0
      %419 = vmatpush2.bf16.xpose.msra.mxu0 0
      %420 = vmatprep.subr.bf16.mxu0 0
      %421 = vmatpush2.bf16.xpose.msra.mxu0 0
      %422 = vmatprep.subr.bf16.mxu0 0
      %423 = vmatpush2.bf16.xpose.msra.mxu0 0
      %424 = vmatprep.subr.bf16.mxu0 0
      %425 = vmatpush2.bf16.xpose.msra.mxu0 0
      %426 = vmatprep.subr.bf16.mxu0 0
      %427 = vmatpush2.bf16.xpose.msra.mxu0 0
      %428 = vmatprep.subr.bf16.mxu0 0
      %429 = vmatpush2.bf16.xpose.msra.mxu0 0
      %430 = vmatprep.subr.bf16.mxu0 0
      %431 = vmatpush2.bf16.xpose.msra.mxu0 0
      %432 = vmatprep.mubr.bf16.mxu0 0
      %433 = vmatmul.mubr.bf16.gmra.mxu0 %v395
      %v434 = vpop.f32.mrf.mxu0
      %v435 = vadd.f32 0.0, %v434
      %v436 = vpop.f32.mrf.mxu0
      %v437 = vpop.f32.mrf.mxu0
      %v438 = vpop.f32.mrf.mxu0
      %439 = vdwg.mxu0
      %v440 = vsel %vm255, %v297, -inf
      %441 = vmax.xlane.f32.xlu0 %v440
      %v442 = vpop.xlane.xlu0 %441
      %v443 = vsel %vm255, %v343, -inf
      %444 = vmax.xlane.f32.xlu0 %v443
      %v445 = vpop.xlane.xlu0 %444
      %v446 = vsel %vm255, %v389, -inf
      %447 = vmax.xlane.f32.xlu0 %v446
      %v448 = vpop.xlane.xlu0 %447
      %v449 = vsel %vm255, %v435, -inf
      %450 = vmax.xlane.f32.xlu0 %v449
      %v451 = vpop.xlane.xlu0 %450
      %v452 = vsub.f32 %v297, %v442
      %v453 = vsub.f32 %v343, %v445
      %v454 = vsub.f32 %v389, %v448
      %v455 = vsub.f32 %v435, %v451
      %v456 = vmul.f32 %v452, 1.442695
      %v457 = vpow.pop %v456
      %v458 = vmul.f32 %v453, 1.442695
      %v459 = vpow.pop %v458
      %v460 = vmul.f32 %v454, 1.442695
      %v461 = vpow.pop %v460
      %v462 = vmul.f32 %v455, 1.442695
      %v463 = vpow.pop %v462
      %v464 = vsel %vm255, %v457, 0.0
      %465 = vadd.xlane.f32.xlu0 %v464
      %v466 = vpop.xlane.xlu0 %465
      %v467 = vsel %vm255, %v459, 0.0
      %468 = vadd.xlane.f32.xlu0 %v467
      %v469 = vpop.xlane.xlu0 %468
      %v470 = vsel %vm255, %v461, 0.0
      %471 = vadd.xlane.f32.xlu0 %v470
      %v472 = vpop.xlane.xlu0 %471
      %v473 = vsel %vm255, %v463, 0.0
      %474 = vadd.xlane.f32.xlu0 %v473
      %v475 = vpop.xlane.xlu0 %474
      %v476 = vrcp.pop %v466
      %v477 = vrcp.pop %v469
      %v478 = vrcp.pop %v472
      %v479 = vrcp.pop %v475
      %v480 = vmul.f32 %v457, %v476
      %v481 = vmul.f32 %v459, %v477
      %v482 = vmul.f32 %v461, %v478
      %v483 = vmul.f32 %v463, %v479
      %v484 = vpack.c.bf16 %v480, %v480
      %v485 = vpack.c.bf16 %v481, %v481
      %v486 = vpack.c.bf16 %v482, %v482
      %v487 = vpack.c.bf16 %v483, %v483
      %v489 = vsel %vm255, %v484, 0
      %vm491 = vcmask 1043456
      %v493 = vsel %vm491, %v251, 0
      %495 = vmatprep.subr.bf16.mxu0 0
      %496 = vmatpush1.bf16.msra.mxu0 0
      %497 = vmatprep.subr.bf16.mxu0 0
      %498 = vmatpush1.bf16.msra.mxu0 0
      %499 = vmatprep.subr.bf16.mxu0 0
      %500 = vmatpush1.bf16.msra.mxu0 0
      %501 = vmatprep.subr.bf16.mxu0 0
      %502 = vmatpush1.bf16.msra.mxu0 0
      %503 = vmatprep.subr.bf16.mxu0 0
      %504 = vmatpush1.bf16.msra.mxu0 0
      %505 = vmatprep.subr.bf16.mxu0 0
      %506 = vmatpush1.bf16.msra.mxu0 0
      %507 = vmatprep.subr.bf16.mxu0 0
      %508 = vmatpush1.bf16.msra.mxu0 0
      %509 = vmatprep.subr.bf16.mxu0 0
      %510 = vmatpush1.bf16.msra.mxu0 %v493
      %511 = vmatprep.subr.bf16.mxu0 0
      %512 = vmatpush2.bf16.msra.mxu0 0
      %513 = vmatprep.subr.bf16.mxu0 0
      %514 = vmatpush2.bf16.msra.mxu0 0
      %515 = vmatprep.subr.bf16.mxu0 0
      %516 = vmatpush2.bf16.msra.mxu0 0
      %517 = vmatprep.subr.bf16.mxu0 0
      %518 = vmatpush2.bf16.msra.mxu0 0
      %519 = vmatprep.subr.bf16.mxu0 0
      %520 = vmatpush2.bf16.msra.mxu0 0
      %521 = vmatprep.subr.bf16.mxu0 0
      %522 = vmatpush2.bf16.msra.mxu0 0
      %523 = vmatprep.subr.bf16.mxu0 0
      %524 = vmatpush2.bf16.msra.mxu0 0
      %525 = vmatprep.subr.bf16.mxu0 0
      %526 = vmatpush2.bf16.msra.mxu0 0
      %527 = vmatprep.mubr.bf16.mxu0 0
      %528 = vmatmul.mubr.bf16.gmra.mxu0 %v489
      %v529 = vpop.f32.mrf.mxu0
      %v530 = vadd.f32 0.0, %v529
      %v531 = vpop.f32.mrf.mxu0
      %v532 = vpop.f32.mrf.mxu0
      %v533 = vpop.f32.mrf.mxu0
      %534 = vdwg.mxu0
      %v536 = vsel %vm255, %v485, 0
      %v539 = vsel %vm491, %v252, 0
      %541 = vmatprep.subr.bf16.mxu0 0
      %542 = vmatpush1.bf16.msra.mxu0 0
      %543 = vmatprep.subr.bf16.mxu0 0
      %544 = vmatpush1.bf16.msra.mxu0 0
      %545 = vmatprep.subr.bf16.mxu0 0
      %546 = vmatpush1.bf16.msra.mxu0 0
      %547 = vmatprep.subr.bf16.mxu0 0
      %548 = vmatpush1.bf16.msra.mxu0 0
      %549 = vmatprep.subr.bf16.mxu0 0
      %550 = vmatpush1.bf16.msra.mxu0 0
      %551 = vmatprep.subr.bf16.mxu0 0
      %552 = vmatpush1.bf16.msra.mxu0 0
      %553 = vmatprep.subr.bf16.mxu0 0
      %554 = vmatpush1.bf16.msra.mxu0 0
      %555 = vmatprep.subr.bf16.mxu0 0
      %556 = vmatpush1.bf16.msra.mxu0 %v539
      %557 = vmatprep.subr.bf16.mxu0 0
      %558 = vmatpush2.bf16.msra.mxu0 0
      %559 = vmatprep.subr.bf16.mxu0 0
      %560 = vmatpush2.bf16.msra.mxu0 0
      %561 = vmatprep.subr.bf16.mxu0 0
      %562 = vmatpush2.bf16.msra.mxu0 0
      %563 = vmatprep.subr.bf16.mxu0 0
      %564 = vmatpush2.bf16.msra.mxu0 0
      %565 = vmatprep.subr.bf16.mxu0 0
      %566 = vmatpush2.bf16.msra.mxu0 0
      %567 = vmatprep.subr.bf16.mxu0 0
      %568 = vmatpush2.bf16.msra.mxu0 0
      %569 = vmatprep.subr.bf16.mxu0 0
      %570 = vmatpush2.bf16.msra.mxu0 0
      %571 = vmatprep.subr.bf16.mxu0 0
      %572 = vmatpush2.bf16.msra.mxu0 0
      %573 = vmatprep.mubr.bf16.mxu0 0
      %574 = vmatmul.mubr.bf16.gmra.mxu0 %v536
      %v575 = vpop.f32.mrf.mxu0
      %v576 = vadd.f32 0.0, %v575
      %v577 = vpop.f32.mrf.mxu0
      %v578 = vpop.f32.mrf.mxu0
      %v579 = vpop.f32.mrf.mxu0
      %580 = vdwg.mxu0
      %v582 = vsel %vm255, %v486, 0
      %v585 = vsel %vm491, %v253, 0
      %587 = vmatprep.subr.bf16.mxu0 0
      %588 = vmatpush1.bf16.msra.mxu0 0
      %589 = vmatprep.subr.bf16.mxu0 0
      %590 = vmatpush1.bf16.msra.mxu0 0
      %591 = vmatprep.subr.bf16.mxu0 0
      %592 = vmatpush1.bf16.msra.mxu0 0
      %593 = vmatprep.subr.bf16.mxu0 0
      %594 = vmatpush1.bf16.msra.mxu0 0
      %595 = vmatprep.subr.bf16.mxu0 0
      %596 = vmatpush1.bf16.msra.mxu0 0
      %597 = vmatprep.subr.bf16.mxu0 0
      %598 = vmatpush1.bf16.msra.mxu0 0
      %599 = vmatprep.subr.bf16.mxu0 0
      %600 = vmatpush1.bf16.msra.mxu0 0
      %601 = vmatprep.subr.bf16.mxu0 0
      %602 = vmatpush1.bf16.msra.mxu0 %v585
      %603 = vmatprep.subr.bf16.mxu0 0
      %604 = vmatpush2.bf16.msra.mxu0 0
      %605 = vmatprep.subr.bf16.mxu0 0
      %606 = vmatpush2.bf16.msra.mxu0 0
      %607 = vmatprep.subr.bf16.mxu0 0
      %608 = vmatpush2.bf16.msra.mxu0 0
      %609 = vmatprep.subr.bf16.mxu0 0
      %610 = vmatpush2.bf16.msra.mxu0 0
      %611 = vmatprep.subr.bf16.mxu0 0
      %612 = vmatpush2.bf16.msra.mxu0 0
      %613 = vmatprep.subr.bf16.mxu0 0
      %614 = vmatpush2.bf16.msra.mxu0 0
      %615 = vmatprep.subr.bf16.mxu0 0
      %616 = vmatpush2.bf16.msra.mxu0 0
      %617 = vmatprep.subr.bf16.mxu0 0
      %618 = vmatpush2.bf16.msra.mxu0 0
      %619 = vmatprep.mubr.bf16.mxu0 0
      %620 = vmatmul.mubr.bf16.gmra.mxu0 %v582
      %v621 = vpop.f32.mrf.mxu0
      %v622 = vadd.f32 0.0, %v621
      %v623 = vpop.f32.mrf.mxu0
      %v624 = vpop.f32.mrf.mxu0
      %v625 = vpop.f32.mrf.mxu0
      %626 = vdwg.mxu0
      %v628 = vsel %vm255, %v487, 0
      %v631 = vsel %vm491, %v254, 0
      %633 = vmatprep.subr.bf16.mxu0 0
      %634 = vmatpush1.bf16.msra.mxu0 0
      %635 = vmatprep.subr.bf16.mxu0 0
      %636 = vmatpush1.bf16.msra.mxu0 0
      %637 = vmatprep.subr.bf16.mxu0 0
      %638 = vmatpush1.bf16.msra.mxu0 0
      %639 = vmatprep.subr.bf16.mxu0 0
      %640 = vmatpush1.bf16.msra.mxu0 0
      %641 = vmatprep.subr.bf16.mxu0 0
      %642 = vmatpush1.bf16.msra.mxu0 0
      %643 = vmatprep.subr.bf16.mxu0 0
      %644 = vmatpush1.bf16.msra.mxu0 0
      %645 = vmatprep.subr.bf16.mxu0 0
      %646 = vmatpush1.bf16.msra.mxu0 0
      %647 = vmatprep.subr.bf16.mxu0 0
      %648 = vmatpush1.bf16.msra.mxu0 %v631
      %649 = vmatprep.subr.bf16.mxu0 0
      %650 = vmatpush2.bf16.msra.mxu0 0
      %651 = vmatprep.subr.bf16.mxu0 0
      %652 = vmatpush2.bf16.msra.mxu0 0
      %653 = vmatprep.subr.bf16.mxu0 0
      %654 = vmatpush2.bf16.msra.mxu0 0
      %655 = vmatprep.subr.bf16.mxu0 0
      %656 = vmatpush2.bf16.msra.mxu0 0
      %657 = vmatprep.subr.bf16.mxu0 0
      %658 = vmatpush2.bf16.msra.mxu0 0
      %659 = vmatprep.subr.bf16.mxu0 0
      %660 = vmatpush2.bf16.msra.mxu0 0
      %661 = vmatprep.subr.bf16.mxu0 0
      %662 = vmatpush2.bf16.msra.mxu0 0
      %663 = vmatprep.subr.bf16.mxu0 0
      %664 = vmatpush2.bf16.msra.mxu0 0
      %665 = vmatprep.mubr.bf16.mxu0 0
      %666 = vmatmul.mubr.bf16.gmra.mxu0 %v628
      %v667 = vpop.f32.mrf.mxu0
      %v668 = vadd.f32 0.0, %v667
      %v669 = vpop.f32.mrf.mxu0
      %v670 = vpop.f32.mrf.mxu0
      %v671 = vpop.f32.mrf.mxu0
      %672 = vdwg.mxu0
      %v673 = vpack.c.bf16 %v530, %v530
      %v674 = vpack.c.bf16 %v576, %v576
      %v675 = vpack.c.bf16 %v622, %v622
      %v676 = vpack.c.bf16 %v668, %v668
      %vm677 = vcmask 60416
      %678 = vst.msk [vmem:[%s241] sm:$0xf] %vm677, %v673
      %679 = vst.msk [vmem:[%s241 + $0x4] sm:$0xf] %vm677, %v674
      %680 = vst.msk [vmem:[%s241 + $0x8] sm:$0xf] %vm677, %v675
      %681 = vst.msk [vmem:[%s241 + $0xc] sm:$0xf] %vm677, %v676
      %p682 = scmp.lt.s32.totalorder %s18, 1
      %s683 = scalar_select %p682, %s18, 1
      %p684 = scmp.lt.s32.totalorder %s19, 0
      %s685 = scalar_select %p684, %s19, 0
      %s686 = smul.addr %s683, 4
      %s687 = sadd.s32 %s685, %s686
      %s688 = smul.addr %s687, 4
      %s689 = scalar_lea.vmem %s3, %s688
      // Predicated region
      $region33: #{layer_scale_init_block.4} parent=31 // pred_check
        %p690 = pneg %p126
      $region34: #{layer_scale_init_block.4} parent=31 // pred_check_branch
        %692 = sbr.rel (%p690) target = $region36
      $region35: #{layer_scale_init_block.4} parent=31 // pred_region
        _
      $region36: #{layer_scale_init_block.4} parent=31 // pred_fallthru
        _
    $region32: #{layer_scale_init_block.4} parent=5 // pred_fallthru
      _
    %p693 = scmp.le.s32.totalorder 2, %s9
    // Predicated region
    $region37: #{layer_scale_init_block.4} parent=5 // pred_check
      %p694 = pneg %p693
    $region38: #{layer_scale_init_block.4} parent=5 // pred_check_branch
      %696 = sbr.rel (%p694) target = $region40
    $region39: #{layer_scale_init_block.4} parent=5 // pred_region
      %s697 = ssub.s32 %s9, 2
      // Predicated region
      $region41: #{layer_scale_init_block.4} parent=39 // pred_check
        %p698 = pneg %p132
      $region42: #{layer_scale_init_block.4} parent=39 // pred_check_branch
        %700 = sbr.rel (%p698) target = $region44
      $region43: #{layer_scale_init_block.4} parent=39 // pred_region
        %p701 = scmp.lt.s32.totalorder %s20, 1
        %s702 = scalar_select %p701, %s20, 1
        %p703 = scmp.lt.s32.totalorder %s21, 0
        %s704 = scalar_select %p703, %s21, 0
        %s705 = smul.addr %s702, 4
        %s706 = sadd.s32 %s704, %s705
        %s707 = smul.addr %s706, 4
        %s708 = scalar_lea.vmem %s3, %s707
      $region44: #{layer_scale_init_block.4} parent=39 // pred_fallthru
        _
    $region40: #{layer_scale_init_block.4} parent=5 // pred_fallthru
      _
  $region6: #{layer_scale_init_block.4} parent=0 // loop_footer
    %s13 = sadd.s32 1, %s9
  $region7: #{layer_scale_init_block.4} parent=0 // loop_footer_branch
    %8 = sbr.rel target = $region3
  $region8: #{layer_scale_init_block.4} parent=0 // loop_exit
    _

// kernel: layer_scale_init_block.3
$region0: #{layer_scale_init_block.3}
  #allocation0 [shape = 'u32[]', space=smem, size = 0x4, offset = 0x4, fixed_abs, tag = 'smem constant byte address 0x4 - core index']
  #allocation1 [shape = 'u32[144,128]{1,0:T(1,128)}', space=vmem, size = 0x12000, scoped, tag = 'internal scratch']
  %s0 = inlined_call_operand.vmem [shape: f32[2,8,32], index: 0, kind: input, shape index: {}]
  %s1 = inlined_call_operand.vmem [shape: f32[1,32], index: 1, kind: input, shape index: {}]
  %s2 = inlined_call_operand.vmem [shape: f32[1,32], index: 2, kind: input, shape index: {}]
  %s3 = inlined_call_operand.hbm [shape: bf16[32,32], index: 3, kind: input, shape index: {}]
  %s4 = inlined_call_operand.hbm [shape: bf16[32,32], index: 4, kind: input, shape index: {}]
  %s5 = inlined_call_operand.hbm [shape: bf16[32,32], index: 5, kind: input, shape index: {}]
  %s6 = inlined_call_operand.vmem [shape: bf16[2,8,32], index: 6, kind: output, shape index: {0}]
  %s7 = inlined_call_operand.vmem [shape: bf16[2,8,32], index: 7, kind: output, shape index: {1}]
  %s8 = inlined_call_operand.vmem [shape: bf16[2,8,32], index: 8, kind: output, shape index: {2}]
  %9 = xla_tuple %s6, %s7, %s8
  %s10 = sld [smem:[#allocation0]]
  $region85: #{layer_scale_init_block.3} parent=0
    _
  %s12 = ssub.s32 1, %s10
  %s13 = scalar_select 0, %s12, %s10
  $region1: #{layer_scale_init_block.3} parent=0
    #allocation2 [shape = 'u8[8192]{0}', space=vmem, size = 0x2000, scoped, tag = 'input window, operand 3, single buffered']
    #allocation3 [shape = 's32[2]{0}', space=sflag, size = 0x8, scoped, tag = 'scoped memory for layer_scale_init_block.3']
    #allocation4 [shape = 'u8[8192]{0}', space=vmem, size = 0x2000, scoped, tag = 'input window, operand 4, single buffered']
    #allocation5 [shape = 's32[1]{0}', space=sflag, size = 0x4, scoped, tag = 'scoped memory for layer_scale_init_block.3']
    #allocation6 [shape = 'u8[8192]{0}', space=vmem, size = 0x2000, scoped, tag = 'input window, operand 5, single buffered']
    %14 = vsyncpa [#allocation3], 0
    %15 = vsyncpa [#allocation5], 0
    loop: start=0, step=1, limit=4
    $region2: #{layer_scale_init_block.3} parent=1 // loop_pre_header
      _
    $region3: #{layer_scale_init_block.3} parent=1 // loop_header
      %s17 = sphi 0, %s21
      %p18 = scmp.ge.s32.totalorder %s17, 4
      %s24 = sphi 0, %s36
      %s25 = sphi 0, %s32
      %s26 = sphi 0, %s24
      %s27 = sphi 0, %s25
      %s28 = sphi 0, %s26
      %s29 = sphi 0, %s27
      %s41 = sphi 0, %s43
      %s44 = sphi 0, %s41
      %s45 = sphi 0, %s44
      %s61 = sphi 0, %s45
      %s65 = sphi 0, %s65
      %s67 = sphi 0, %s65
      %s68 = sphi 0, %s67
      %s82 = sphi 0, %s68
      %s86 = sphi 0, %s86
      %s88 = sphi 0, %s86
      %s89 = sphi 0, %s88
      %s103 = sphi 0, %s89
      %s107 = sphi 0, %s107
      %s109 = sphi 0, %s107
      %s110 = sphi 0, %s109
      %s124 = sphi 0, %s110
      %s128 = sphi 0, %s128
      %s130 = sphi 0, %s128
      %s131 = sphi 0, %s130
      %s145 = sphi 0, %s131
      %s149 = sphi 0, %s149
      %s151 = sphi 0, %s149
      %s152 = sphi 0, %s151
      %s166 = sphi 0, %s152
      %s174 = sphi 0, %s176
      %s177 = sphi 0, %s174
      %s178 = sphi 0, %s177
      %s194 = sphi 0, %s178
      %s202 = sphi 0, %s204
      %s205 = sphi 0, %s202
      %s206 = sphi 0, %s205
      %s222 = sphi 0, %s206
      %s230 = sphi 0, %s232
      %s233 = sphi 0, %s230
      %s234 = sphi 0, %s233
      %s250 = sphi 0, %s234
    $region4: #{layer_scale_init_block.3} parent=1 // loop_header_branch
      %20 = sbr.rel (%p18) target = $region8
    $region5: #{layer_scale_init_block.3} parent=1 // loop_body
      %s22 = ssub.s32 %s17, 1
      %s23 = ssub.s32 %s17, 2
      %s30 = sadd.s32 1, %s25
      %p31 = scmp.ge.s32.totalorder %s30, 1
      %s32 = scalar_select %p31, 0, %s30
      %s33 = sadd.s32 1, %s24
      %s34 = scalar_select %p31, %s33, %s24
      %p35 = scmp.ge.s32.totalorder %s34, 2
      %s36 = scalar_select %p35, 0, %s34
      %s37 = ssub.s32 %s24, %s36
      %s38 = ssub.s32 %s25, %s32
      %s39 = sor.u32 %s37, %s38
      %p40 = scmp.eq.s32.totalorder %s39, 0
      %s42 = sadd.s32 %s41, 1
      %s43 = scalar_select %p40, %s41, %s42
      %p46 = pneg %p40
      %p47 = scmp.eq.s32.totalorder %s17, 1
      %p48 = por %p46, %p47
      %p49 = scmp.ne.s32.totalorder %s41, %s44
      %p50 = scmp.eq.s32.totalorder %s17, 0
      %p51 = por %p49, %p50
      %p52 = scmp.ne.s32.totalorder %s41, %s44
      %p53 = scmp.eq.s32.totalorder %s22, 1
      %p54 = por %p52, %p53
      %p55 = scmp.ne.s32.totalorder %s44, %s45
      %p56 = scmp.eq.s32.totalorder %s22, 0
      %p57 = por %p55, %p56
      %p58 = scmp.ne.s32.totalorder %s44, %s45
      %p59 = scmp.eq.s32.totalorder %s23, 1
      %p60 = por %p58, %p59
      %p62 = scmp.ne.s32.totalorder %s45, %s61
      %p63 = scmp.eq.s32.totalorder %s23, 0
      %p64 = por %p62, %p63
      %s66 = sadd.s32 %s65, 1
      %p69 = scmp.eq.s32.totalorder %s17, 1
      %p70 = scmp.ne.s32.totalorder %s65, %s67
      %p71 = scmp.eq.s32.totalorder %s17, 0
      %p72 = por %p70, %p71
      %p73 = scmp.ne.s32.totalorder %s65, %s67
      %p74 = scmp.eq.s32.totalorder %s22, 1
      %p75 = por %p73, %p74
      %p76 = scmp.ne.s32.totalorder %s67, %s68
      %p77 = scmp.eq.s32.totalorder %s22, 0
      %p78 = por %p76, %p77
      %p79 = scmp.ne.s32.totalorder %s67, %s68
      %p80 = scmp.eq.s32.totalorder %s23, 1
      %p81 = por %p79, %p80
      %p83 = scmp.ne.s32.totalorder %s68, %s82
      %p84 = scmp.eq.s32.totalorder %s23, 0
      %p85 = por %p83, %p84
      %s87 = sadd.s32 %s86, 1
      %p90 = scmp.eq.s32.totalorder %s17, 1
      %p91 = scmp.ne.s32.totalorder %s86, %s88
      %p92 = scmp.eq.s32.totalorder %s17, 0
      %p93 = por %p91, %p92
      %p94 = scmp.ne.s32.totalorder %s86, %s88
      %p95 = scmp.eq.s32.totalorder %s22, 1
      %p96 = por %p94, %p95
      %p97 = scmp.ne.s32.totalorder %s88, %s89
      %p98 = scmp.eq.s32.totalorder %s22, 0
      %p99 = por %p97, %p98
      %p100 = scmp.ne.s32.totalorder %s88, %s89
      %p101 = scmp.eq.s32.totalorder %s23, 1
      %p102 = por %p100, %p101
      %p104 = scmp.ne.s32.totalorder %s89, %s103
      %p105 = scmp.eq.s32.totalorder %s23, 0
      %p106 = por %p104, %p105
      %s108 = sadd.s32 %s107, 1
      %p111 = scmp.eq.s32.totalorder %s17, 1
      %p112 = scmp.ne.s32.totalorder %s107, %s109
      %p113 = scmp.eq.s32.totalorder %s17, 0
      %p114 = por %p112, %p113
      %p115 = scmp.ne.s32.totalorder %s107, %s109
      %p116 = scmp.eq.s32.totalorder %s22, 1
      %p117 = por %p115, %p116
      %p118 = scmp.ne.s32.totalorder %s109, %s110
      %p119 = scmp.eq.s32.totalorder %s22, 0
      %p120 = por %p118, %p119
      %p121 = scmp.ne.s32.totalorder %s109, %s110
      %p122 = scmp.eq.s32.totalorder %s23, 1
      %p123 = por %p121, %p122
      %p125 = scmp.ne.s32.totalorder %s110, %s124
      %p126 = scmp.eq.s32.totalorder %s23, 0
      %p127 = por %p125, %p126
      %s129 = sadd.s32 %s128, 1
      %p132 = scmp.eq.s32.totalorder %s17, 1
      %p133 = scmp.ne.s32.totalorder %s128, %s130
      %p134 = scmp.eq.s32.totalorder %s17, 0
      %p135 = por %p133, %p134
      %p136 = scmp.ne.s32.totalorder %s128, %s130
      %p137 = scmp.eq.s32.totalorder %s22, 1
      %p138 = por %p136, %p137
      %p139 = scmp.ne.s32.totalorder %s130, %s131
      %p140 = scmp.eq.s32.totalorder %s22, 0
      %p141 = por %p139, %p140
      %p142 = scmp.ne.s32.totalorder %s130, %s131
      %p143 = scmp.eq.s32.totalorder %s23, 1
      %p144 = por %p142, %p143
      %p146 = scmp.ne.s32.totalorder %s131, %s145
      %p147 = scmp.eq.s32.totalorder %s23, 0
      %p148 = por %p146, %p147
      %s150 = sadd.s32 %s149, 1
      %p153 = scmp.eq.s32.totalorder %s17, 1
      %p154 = scmp.ne.s32.totalorder %s149, %s151
      %p155 = scmp.eq.s32.totalorder %s17, 0
      %p156 = por %p154, %p155
      %p157 = scmp.ne.s32.totalorder %s149, %s151
      %p158 = scmp.eq.s32.totalorder %s22, 1
      %p159 = por %p157, %p158
      %p160 = scmp.ne.s32.totalorder %s151, %s152
      %p161 = scmp.eq.s32.totalorder %s22, 0
      %p162 = por %p160, %p161
      %p163 = scmp.ne.s32.totalorder %s151, %s152
      %p164 = scmp.eq.s32.totalorder %s23, 1
      %p165 = por %p163, %p164
      %p167 = scmp.ne.s32.totalorder %s152, %s166
      %p168 = scmp.eq.s32.totalorder %s23, 0
      %p169 = por %p167, %p168
      %s170 = ssub.s32 %s24, %s36
      %s171 = ssub.s32 %s25, %s32
      %s172 = sor.u32 %s170, %s171
      %p173 = scmp.eq.s32.totalorder %s172, 0
      %s175 = sadd.s32 %s174, 1
      %s176 = scalar_select %p173, %s174, %s175
      %p179 = pneg %p173
      %p180 = scmp.eq.s32.totalorder %s17, 1
      %p181 = por %p179, %p180
      %p182 = scmp.ne.s32.totalorder %s174, %s177
      %p183 = scmp.eq.s32.totalorder %s17, 0
      %p184 = por %p182, %p183
      %p185 = scmp.ne.s32.totalorder %s174, %s177
      %p186 = scmp.eq.s32.totalorder %s22, 1
      %p187 = por %p185, %p186
      %p188 = scmp.ne.s32.totalorder %s177, %s178
      %p189 = scmp.eq.s32.totalorder %s22, 0
      %p190 = por %p188, %p189
      %p191 = scmp.ne.s32.totalorder %s177, %s178
      %p192 = scmp.eq.s32.totalorder %s23, 1
      %p193 = por %p191, %p192
      %p195 = scmp.ne.s32.totalorder %s178, %s194
      %p196 = scmp.eq.s32.totalorder %s23, 0
      %p197 = por %p195, %p196
      %s198 = ssub.s32 %s24, %s36
      %s199 = ssub.s32 %s25, %s32
      %s200 = sor.u32 %s198, %s199
      %p201 = scmp.eq.s32.totalorder %s200, 0
      %s203 = sadd.s32 %s202, 1
      %s204 = scalar_select %p201, %s202, %s203
      %p207 = pneg %p201
      %p208 = scmp.eq.s32.totalorder %s17, 1
      %p209 = por %p207, %p208
      %p210 = scmp.ne.s32.totalorder %s202, %s205
      %p211 = scmp.eq.s32.totalorder %s17, 0
      %p212 = por %p210, %p211
      %p213 = scmp.ne.s32.totalorder %s202, %s205
      %p214 = scmp.eq.s32.totalorder %s22, 1
      %p215 = por %p213, %p214
      %p216 = scmp.ne.s32.totalorder %s205, %s206
      %p217 = scmp.eq.s32.totalorder %s22, 0
      %p218 = por %p216, %p217
      %p219 = scmp.ne.s32.totalorder %s205, %s206
      %p220 = scmp.eq.s32.totalorder %s23, 1
      %p221 = por %p219, %p220
      %p223 = scmp.ne.s32.totalorder %s206, %s222
      %p224 = scmp.eq.s32.totalorder %s23, 0
      %p225 = por %p223, %p224
      %s226 = ssub.s32 %s24, %s36
      %s227 = ssub.s32 %s25, %s32
      %s228 = sor.u32 %s226, %s227
      %p229 = scmp.eq.s32.totalorder %s228, 0
      %s231 = sadd.s32 %s230, 1
      %s232 = scalar_select %p229, %s230, %s231
      %p235 = pneg %p229
      %p236 = scmp.eq.s32.totalorder %s17, 1
      %p237 = por %p235, %p236
      %p238 = scmp.ne.s32.totalorder %s230, %s233
      %p239 = scmp.eq.s32.totalorder %s17, 0
      %p240 = por %p238, %p239
      %p241 = scmp.ne.s32.totalorder %s230, %s233
      %p242 = scmp.eq.s32.totalorder %s22, 1
      %p243 = por %p241, %p242
      %p244 = scmp.ne.s32.totalorder %s233, %s234
      %p245 = scmp.eq.s32.totalorder %s22, 0
      %p246 = por %p244, %p245
      %p247 = scmp.ne.s32.totalorder %s233, %s234
      %p248 = scmp.eq.s32.totalorder %s23, 1
      %p249 = por %p247, %p248
      %p251 = scmp.ne.s32.totalorder %s234, %s250
      %p252 = scmp.eq.s32.totalorder %s23, 0
      %p253 = por %p251, %p252
      %p254 = scmp.le.s32.totalorder 1, %s17
      %p255 = scmp.lt.s32.totalorder %s17, 3
      %p256 = pnand %p254, %p255
      %p257 = pneg %p256
      // Predicated region
      $region9: #{layer_scale_init_block.3} parent=5 // pred_check
        _
      $region10: #{layer_scale_init_block.3} parent=5 // pred_check_branch
        %259 = sbr.rel (%p256) target = $region12
      $region11: #{layer_scale_init_block.3} parent=5 // pred_region
        %s260 = ssub.s32 %s17, 1
        // Predicated region
        $region13: #{layer_scale_init_block.3} parent=11 // pred_check
          %p261 = pneg %p78
        $region14: #{layer_scale_init_block.3} parent=11 // pred_check_branch
          %263 = sbr.rel (%p261) target = $region16
        $region15: #{layer_scale_init_block.3} parent=11 // pred_region
          _
        $region16: #{layer_scale_init_block.3} parent=11 // pred_fallthru
          _
        // Predicated region
        $region17: #{layer_scale_init_block.3} parent=11 // pred_check
          %p264 = pneg %p99
        $region18: #{layer_scale_init_block.3} parent=11 // pred_check_branch
          %266 = sbr.rel (%p264) target = $region20
        $region19: #{layer_scale_init_block.3} parent=11 // pred_region
          _
        $region20: #{layer_scale_init_block.3} parent=11 // pred_fallthru
          _
        // Predicated region
        $region21: #{layer_scale_init_block.3} parent=11 // pred_check
          %p267 = pneg %p120
        $region22: #{layer_scale_init_block.3} parent=11 // pred_check_branch
          %269 = sbr.rel (%p267) target = $region24
        $region23: #{layer_scale_init_block.3} parent=11 // pred_region
          %s271 = ssub.s32 256, 256
          %272 = vsyncadd [#allocation3], %s271
          %s273 = sshll.u32 [#allocation2], 4
          %s274 = int_to_ptr.vmem [resolvable:$true] %s273
          %279 = dma.hbm_to_vmem [thread:$0]  %s3, 256, %s274, [#allocation3], 64, 64, 4
        $region24: #{layer_scale_init_block.3} parent=11 // pred_fallthru
          _
        // Predicated region
        $region25: #{layer_scale_init_block.3} parent=11 // pred_check
          %p280 = pneg %p141
        $region26: #{layer_scale_init_block.3} parent=11 // pred_check_branch
          %282 = sbr.rel (%p280) target = $region28
        $region27: #{layer_scale_init_block.3} parent=11 // pred_region
          %s284 = ssub.s32 256, 256
          %285 = vsyncadd [#allocation5], %s284
          %s286 = sshll.u32 [#allocation4], 4
          %s287 = int_to_ptr.vmem [resolvable:$true] %s286
          %292 = dma.hbm_to_vmem [thread:$0]  %s4, 256, %s287, [#allocation5], 64, 64, 4
        $region28: #{layer_scale_init_block.3} parent=11 // pred_fallthru
          _
        // Predicated region
        $region29: #{layer_scale_init_block.3} parent=11 // pred_check
          %p293 = pneg %p162
        $region30: #{layer_scale_init_block.3} parent=11 // pred_check_branch
          %295 = sbr.rel (%p293) target = $region32
        $region31: #{layer_scale_init_block.3} parent=11 // pred_region
          %s297 = ssub.s32 256, 256
          %298 = vsyncadd [#allocation5], %s297
          %s299 = sshll.u32 [#allocation6], 4
          %s300 = int_to_ptr.vmem [resolvable:$true] %s299
          %305 = dma.hbm_to_vmem [thread:$0]  %s5, 256, %s300, [#allocation5], 64, 64, 4
        $region32: #{layer_scale_init_block.3} parent=11 // pred_fallthru
          _
      $region12: #{layer_scale_init_block.3} parent=5 // pred_fallthru
        _
      %p306 = scmp.lt.s32.totalorder %s17, 2
      // Predicated region
      $region33: #{layer_scale_init_block.3} parent=5 // pred_check
        %p307 = pneg %p306
      $region34: #{layer_scale_init_block.3} parent=5 // pred_check_branch
        %309 = sbr.rel (%p307) target = $region36
      $region35: #{layer_scale_init_block.3} parent=5 // pred_region
        // Predicated region
        $region37: #{layer_scale_init_block.3} parent=35 // pred_check
          %p310 = pneg %p51
        $region38: #{layer_scale_init_block.3} parent=35 // pred_check_branch
          %312 = sbr.rel (%p310) target = $region40
        $region39: #{layer_scale_init_block.3} parent=35 // pred_region
          %p313 = scmp.lt.s32.totalorder %s24, 1
          %s314 = scalar_select %p313, %s24, 1
          %p315 = scmp.lt.s32.totalorder %s25, 0
          %s316 = scalar_select %p315, %s25, 0
          %s317 = sadd.s32 %s316, %s314
          %s318 = smul.addr %s317, 8
          %s319 = scalar_lea.vmem %s0, %s318
        $region40: #{layer_scale_init_block.3} parent=35 // pred_fallthru
          _
      $region36: #{layer_scale_init_block.3} parent=5 // pred_fallthru
        _
      %p320 = scmp.le.s32.totalorder 1, %s17
      %p321 = scmp.lt.s32.totalorder %s17, 3
      %p322 = pnand %p320, %p321
      %p323 = pneg %p322
      // Predicated region
      $region41: #{layer_scale_init_block.3} parent=5 // pred_check
        _
      $region42: #{layer_scale_init_block.3} parent=5 // pred_check_branch
        %325 = sbr.rel (%p322) target = $region44
      $region43: #{layer_scale_init_block.3} parent=5 // pred_region
        %s326 = ssub.s32 %s17, 1
        // Predicated region
        $region45: #{layer_scale_init_block.3} parent=43 // pred_check
          %p327 = pneg %p120
        $region46: #{layer_scale_init_block.3} parent=43 // pred_check_branch
          %329 = sbr.rel (%p327) target = $region48
        $region47: #{layer_scale_init_block.3} parent=43 // pred_region
          %330 = dma.done [#allocation3], 256
        $region48: #{layer_scale_init_block.3} parent=43 // pred_fallthru
          _
        // Predicated region
        $region49: #{layer_scale_init_block.3} parent=43 // pred_check
          %p331 = pneg %p141
        $region50: #{layer_scale_init_block.3} parent=43 // pred_check_branch
          %333 = sbr.rel (%p331) target = $region52
        $region51: #{layer_scale_init_block.3} parent=43 // pred_region
          %334 = dma.done [#allocation5], 256
        $region52: #{layer_scale_init_block.3} parent=43 // pred_fallthru
          _
        // Predicated region
        $region53: #{layer_scale_init_block.3} parent=43 // pred_check
          %p335 = pneg %p162
        $region54: #{layer_scale_init_block.3} parent=43 // pred_check_branch
          %337 = sbr.rel (%p335) target = $region56
        $region55: #{layer_scale_init_block.3} parent=43 // pred_region
          %338 = dma.done [#allocation5], 256
        $region56: #{layer_scale_init_block.3} parent=43 // pred_fallthru
          _
        %p339 = scmp.lt.s32.totalorder %s26, 1
        %s340 = scalar_select %p339, %s26, 1
        %p341 = scmp.lt.s32.totalorder %s27, 0
        %s342 = scalar_select %p341, %s27, 0
        %s343 = sadd.s32 %s342, %s340
        %s344 = smul.addr %s343, 8
        %s345 = scalar_lea.vmem %s0, %s344
        %p346 = pneg %p57
        %p347 = pneg %p54
        %p348 = pneg %p78
        %p349 = pneg %p75
        %p350 = pneg %p99
        %p351 = pneg %p96
        %p352 = pneg %p120
        %p353 = pneg %p117
        %p354 = pneg %p141
        %p355 = pneg %p138
        %p356 = pneg %p162
        %p357 = pneg %p159
        %p358 = pneg %p190
        %p359 = pneg %p187
        %p360 = scmp.lt.s32.totalorder %s26, 1
        %s361 = scalar_select %p360, %s26, 1
        %p362 = scmp.lt.s32.totalorder %s27, 0
        %s363 = scalar_select %p362, %s27, 0
        %s364 = sadd.s32 %s363, %s361
        %s365 = smul.addr %s364, 4
        %s366 = scalar_lea.vmem %s6, %s365
        %p367 = pneg %p218
        %p368 = pneg %p215
        %p369 = scmp.lt.s32.totalorder %s26, 1
        %s370 = scalar_select %p369, %s26, 1
        %p371 = scmp.lt.s32.totalorder %s27, 0
        %s372 = scalar_select %p371, %s27, 0
        %s373 = sadd.s32 %s372, %s370
        %s374 = smul.addr %s373, 4
        %s375 = scalar_lea.vmem %s7, %s374
        %p376 = pneg %p246
        %p377 = pneg %p243
        %p378 = scmp.lt.s32.totalorder %s26, 1
        %s379 = scalar_select %p378, %s26, 1
        %p380 = scmp.lt.s32.totalorder %s27, 0
        %s381 = scalar_select %p380, %s27, 0
        %s382 = sadd.s32 %s381, %s379
        %s383 = smul.addr %s382, 4
        %s384 = scalar_lea.vmem %s8, %s383
        %p385 = scmp.lt.s32.totalorder %s26, 1
        %s386 = scalar_select %p385, %s26, 1
        %p387 = scmp.lt.s32.totalorder %s27, 0
        %s388 = scalar_select %p387, %s27, 0
        %s389 = sadd.s32 %s388, %s386
        %s390 = smul.addr %s389, 8
        %s391 = scalar_lea.vmem %s0, %s390
        %p392 = scmp.lt.s32.totalorder %s26, 1
        %s393 = scalar_select %p392, %s26, 1
        %p394 = scmp.lt.s32.totalorder %s27, 0
        %s395 = scalar_select %p394, %s27, 0
        %s396 = sadd.s32 %s395, %s393
        %s397 = smul.addr %s396, 4
        %s398 = scalar_lea.vmem %s6, %s397
        %p399 = scmp.lt.s32.totalorder %s26, 1
        %s400 = scalar_select %p399, %s26, 1
        %p401 = scmp.lt.s32.totalorder %s27, 0
        %s402 = scalar_select %p401, %s27, 0
        %s403 = sadd.s32 %s402, %s400
        %s404 = smul.addr %s403, 4
        %s405 = scalar_lea.vmem %s7, %s404
        %p406 = scmp.lt.s32.totalorder %s26, 1
        %s407 = scalar_select %p406, %s26, 1
        %p408 = scmp.lt.s32.totalorder %s27, 0
        %s409 = scalar_select %p408, %s27, 0
        %s410 = sadd.s32 %s409, %s407
        %s411 = smul.addr %s410, 4
        %s412 = scalar_lea.vmem %s8, %s411
        %v414 = vld [vmem:[%s391] sm:$0xff]
        %v415 = vld [vmem:[%s1] sm:$0x1]
        %v416 = vld [vmem:[%s2] sm:$0x1]
        %vm417 = vcmask 261120
        %v418 = vsel %vm417, %v414, 0.0
        %419 = vadd.xlane.f32.xlu0 %v418
        %v420 = vpop.xlane.xlu0 %419
        %v421 = vrcp.pop 32.0
        %v422 = vmul.f32 %v420, %v421
        %v423 = vsub.f32 %v414, %v422
        %v424 = vmul.f32 %v423, %v423
        %v425 = vsel %vm417, %v424, 0.0
        %426 = vadd.xlane.f32.xlu0 %v425
        %v427 = vpop.xlane.xlu0 %426
        %v428 = vmul.f32 %v427, %v421
        %v429 = vadd.f32 %v428, 1e-05
        %v430 = vrsqrt.pop %v429
        %v431 = vmul.f32 %v423, %v430
        %v433 = vlaneseq
        %v434 = vshrl.u32 %v433, 7
        %v435 = vsub.s32 0, %v434
        %v436 = vrot.slane %v415, %v435
        %v438 = vmul.f32 %v431, %v436
        %v440 = vlaneseq
        %v441 = vshrl.u32 %v440, 7
        %v442 = vsub.s32 0, %v441
        %v443 = vrot.slane %v416, %v442
        %v445 = vadd.f32 %v438, %v443
        %v446 = vpack.c.bf16 %v445, %v445
        %v447 = vld [vmem:[#allocation2] sm:$0xf]
        %v448 = vld [vmem:[#allocation2 + $0x4] sm:$0xf]
        %v449 = vld [vmem:[#allocation2 + $0x8] sm:$0xf]
        %v450 = vld [vmem:[#allocation2 + $0xc] sm:$0xf]
        %v455 = vunpack.c.l.b16 %v447
        %v456 = vunpack.c.l.b16 %v448
        %v457 = vunpack.c.l.b16 %v449
        %v458 = vunpack.c.l.b16 %v450
        %v459 = vpack.c.b16 %v456, %v455
        %v460 = vpack.c.b16 %v458, %v457
        %v464 = vsel %vm417, %v446, 0
        %466 = vmatprep.subr.bf16.mxu0 0
        %467 = vmatpush1.bf16.msra.mxu0 0
        %468 = vmatprep.subr.bf16.mxu0 0
        %469 = vmatpush1.bf16.msra.mxu0 0
        %470 = vmatprep.subr.bf16.mxu0 0
        %471 = vmatpush1.bf16.msra.mxu0 0
        %472 = vmatprep.subr.bf16.mxu0 0
        %473 = vmatpush1.bf16.msra.mxu0 0
        %474 = vmatprep.subr.bf16.mxu0 0
        %475 = vmatpush1.bf16.msra.mxu0 0
        %476 = vmatprep.subr.bf16.mxu0 0
        %477 = vmatpush1.bf16.msra.mxu0 0
        %478 = vmatprep.subr.bf16.mxu0 0
        %479 = vmatpush1.bf16.msra.mxu0 %v460
        %480 = vmatprep.subr.bf16.mxu0 0
        %481 = vmatpush1.bf16.msra.mxu0 %v459
        %482 = vmatprep.subr.bf16.mxu0 0
        %483 = vmatpush2.bf16.msra.mxu0 0
        %484 = vmatprep.subr.bf16.mxu0 0
        %485 = vmatpush2.bf16.msra.mxu0 0
        %486 = vmatprep.subr.bf16.mxu0 0
        %487 = vmatpush2.bf16.msra.mxu0 0
        %488 = vmatprep.subr.bf16.mxu0 0
        %489 = vmatpush2.bf16.msra.mxu0 0
        %490 = vmatprep.subr.bf16.mxu0 0
        %491 = vmatpush2.bf16.msra.mxu0 0
        %492 = vmatprep.subr.bf16.mxu0 0
        %493 = vmatpush2.bf16.msra.mxu0 0
        %494 = vmatprep.subr.bf16.mxu0 0
        %495 = vmatpush2.bf16.msra.mxu0 0
        %496 = vmatprep.subr.bf16.mxu0 0
        %497 = vmatpush2.bf16.msra.mxu0 0
        %498 = vmatprep.mubr.bf16.mxu0 0
        %499 = vmatmul.mubr.bf16.gmra.mxu0 %v464
        %v500 = vpop.f32.mrf.mxu0
        %v501 = vadd.f32 0.0, %v500
        %v502 = vpop.f32.mrf.mxu0
        %v503 = vpop.f32.mrf.mxu0
        %v504 = vpop.f32.mrf.mxu0
        %505 = vdwg.mxu0
        %v506 = vld [vmem:[#allocation4] sm:$0xf]
        %v507 = vld [vmem:[#allocation4 + $0x4] sm:$0xf]
        %v508 = vld [vmem:[#allocation4 + $0x8] sm:$0xf]
        %v509 = vld [vmem:[#allocation4 + $0xc] sm:$0xf]
        %v514 = vunpack.c.l.b16 %v506
        %v515 = vunpack.c.l.b16 %v507
        %v516 = vunpack.c.l.b16 %v508
        %v517 = vunpack.c.l.b16 %v509
        %v518 = vpack.c.b16 %v515, %v514
        %v519 = vpack.c.b16 %v517, %v516
        %522 = vmatprep.subr.bf16.mxu0 0
        %523 = vmatpush1.bf16.msra.mxu0 0
        %524 = vmatprep.subr.bf16.mxu0 0
        %525 = vmatpush1.bf16.msra.mxu0 0
        %526 = vmatprep.subr.bf16.mxu0 0
        %527 = vmatpush1.bf16.msra.mxu0 0
        %528 = vmatprep.subr.bf16.mxu0 0
        %529 = vmatpush1.bf16.msra.mxu0 0
        %530 = vmatprep.subr.bf16.mxu0 0
        %531 = vmatpush1.bf16.msra.mxu0 0
        %532 = vmatprep.subr.bf16.mxu0 0
        %533 = vmatpush1.bf16.msra.mxu0 0
        %534 = vmatprep.subr.bf16.mxu0 0
        %535 = vmatpush1.bf16.msra.mxu0 %v519
        %536 = vmatprep.subr.bf16.mxu0 0
        %537 = vmatpush1.bf16.msra.mxu0 %v518
        %538 = vmatprep.subr.bf16.mxu0 0
        %539 = vmatpush2.bf16.msra.mxu0 0
        %540 = vmatprep.subr.bf16.mxu0 0
        %541 = vmatpush2.bf16.msra.mxu0 0
        %542 = vmatprep.subr.bf16.mxu0 0
        %543 = vmatpush2.bf16.msra.mxu0 0
        %544 = vmatprep.subr.bf16.mxu0 0
        %545 = vmatpush2.bf16.msra.mxu0 0
        %546 = vmatprep.subr.bf16.mxu0 0
        %547 = vmatpush2.bf16.msra.mxu0 0
        %548 = vmatprep.subr.bf16.mxu0 0
        %549 = vmatpush2.bf16.msra.mxu0 0
        %550 = vmatprep.subr.bf16.mxu0 0
        %551 = vmatpush2.bf16.msra.mxu0 0
        %552 = vmatprep.subr.bf16.mxu0 0
        %553 = vmatpush2.bf16.msra.mxu0 0
        %554 = vmatprep.mubr.bf16.mxu0 0
        %555 = vmatmul.mubr.bf16.gmra.mxu0 %v464
        %v556 = vpop.f32.mrf.mxu0
        %v557 = vadd.f32 0.0, %v556
        %v558 = vpop.f32.mrf.mxu0
        %v559 = vpop.f32.mrf.mxu0
        %v560 = vpop.f32.mrf.mxu0
        %561 = vdwg.mxu0
        %v562 = vld [vmem:[#allocation6] sm:$0xf]
        %v563 = vld [vmem:[#allocation6 + $0x4] sm:$0xf]
        %v564 = vld [vmem:[#allocation6 + $0x8] sm:$0xf]
        %v565 = vld [vmem:[#allocation6 + $0xc] sm:$0xf]
        %v570 = vunpack.c.l.b16 %v562
        %v571 = vunpack.c.l.b16 %v563
        %v572 = vunpack.c.l.b16 %v564
        %v573 = vunpack.c.l.b16 %v565
        %v574 = vpack.c.b16 %v571, %v570
        %v575 = vpack.c.b16 %v573, %v572
        %578 = vmatprep.subr.bf16.mxu0 0
        %579 = vmatpush1.bf16.msra.mxu0 0
        %580 = vmatprep.subr.bf16.mxu0 0
        %581 = vmatpush1.bf16.msra.mxu0 0
        %582 = vmatprep.subr.bf16.mxu0 0
        %583 = vmatpush1.bf16.msra.mxu0 0
        %584 = vmatprep.subr.bf16.mxu0 0
        %585 = vmatpush1.bf16.msra.mxu0 0
        %586 = vmatprep.subr.bf16.mxu0 0
        %587 = vmatpush1.bf16.msra.mxu0 0
        %588 = vmatprep.subr.bf16.mxu0 0
        %589 = vmatpush1.bf16.msra.mxu0 0
        %590 = vmatprep.subr.bf16.mxu0 0
        %591 = vmatpush1.bf16.msra.mxu0 %v575
        %592 = vmatprep.subr.bf16.mxu0 0
        %593 = vmatpush1.bf16.msra.mxu0 %v574
        %594 = vmatprep.subr.bf16.mxu0 0
        %595 = vmatpush2.bf16.msra.mxu0 0
        %596 = vmatprep.subr.bf16.mxu0 0
        %597 = vmatpush2.bf16.msra.mxu0 0
        %598 = vmatprep.subr.bf16.mxu0 0
        %599 = vmatpush2.bf16.msra.mxu0 0
        %600 = vmatprep.subr.bf16.mxu0 0
        %601 = vmatpush2.bf16.msra.mxu0 0
        %602 = vmatprep.subr.bf16.mxu0 0
        %603 = vmatpush2.bf16.msra.mxu0 0
        %604 = vmatprep.subr.bf16.mxu0 0
        %605 = vmatpush2.bf16.msra.mxu0 0
        %606 = vmatprep.subr.bf16.mxu0 0
        %607 = vmatpush2.bf16.msra.mxu0 0
        %608 = vmatprep.subr.bf16.mxu0 0
        %609 = vmatpush2.bf16.msra.mxu0 0
        %610 = vmatprep.mubr.bf16.mxu0 0
        %611 = vmatmul.mubr.bf16.gmra.mxu0 %v464
        %v612 = vpop.f32.mrf.mxu0
        %v613 = vadd.f32 0.0, %v612
        %v614 = vpop.f32.mrf.mxu0
        %v615 = vpop.f32.mrf.mxu0
        %v616 = vpop.f32.mrf.mxu0
        %617 = vdwg.mxu0
        %v618 = vmul.f32 %v501, 0.35355338
        %v619 = vpack.c.bf16 %v618, %v618
        %vm620 = vcmask 257024
        %621 = vst.msk [vmem:[%s398] sm:$0xf] %vm620, %v619
        %v622 = vpack.c.bf16 %v557, %v557
        %623 = vst.msk [vmem:[%s405] sm:$0xf] %vm620, %v622
        %v624 = vpack.c.bf16 %v613, %v613
        %625 = vst.msk [vmem:[%s412] sm:$0xf] %vm620, %v624
        %p626 = scmp.lt.s32.totalorder %s26, 1
        %s627 = scalar_select %p626, %s26, 1
        %p628 = scmp.lt.s32.totalorder %s27, 0
        %s629 = scalar_select %p628, %s27, 0
        %s630 = sadd.s32 %s629, %s627
        %s631 = smul.addr %s630, 4
        %s632 = scalar_lea.vmem %s6, %s631
        %p633 = scmp.lt.s32.totalorder %s26, 1
        %s634 = scalar_select %p633, %s26, 1
        %p635 = scmp.lt.s32.totalorder %s27, 0
        %s636 = scalar_select %p635, %s27, 0
        %s637 = sadd.s32 %s636, %s634
        %s638 = smul.addr %s637, 4
        %s639 = scalar_lea.vmem %s7, %s638
        %p640 = scmp.lt.s32.totalorder %s26, 1
        %s641 = scalar_select %p640, %s26, 1
        %p642 = scmp.lt.s32.totalorder %s27, 0
        %s643 = scalar_select %p642, %s27, 0
        %s644 = sadd.s32 %s643, %s641
        %s645 = smul.addr %s644, 4
        %s646 = scalar_lea.vmem %s8, %s645
        // Predicated region
        $region57: #{layer_scale_init_block.3} parent=43 // pred_check
          %p647 = pneg %p187
        $region58: #{layer_scale_init_block.3} parent=43 // pred_check_branch
          %649 = sbr.rel (%p647) target = $region60
        $region59: #{layer_scale_init_block.3} parent=43 // pred_region
          _
        $region60: #{layer_scale_init_block.3} parent=43 // pred_fallthru
          _
        // Predicated region
        $region61: #{layer_scale_init_block.3} parent=43 // pred_check
          %p650 = pneg %p215
        $region62: #{layer_scale_init_block.3} parent=43 // pred_check_branch
          %652 = sbr.rel (%p650) target = $region64
        $region63: #{layer_scale_init_block.3} parent=43 // pred_region
          _
        $region64: #{layer_scale_init_block.3} parent=43 // pred_fallthru
          _
        // Predicated region
        $region65: #{layer_scale_init_block.3} parent=43 // pred_check
          %p653 = pneg %p243
        $region66: #{layer_scale_init_block.3} parent=43 // pred_check_branch
          %655 = sbr.rel (%p653) target = $region68
        $region67: #{layer_scale_init_block.3} parent=43 // pred_region
          _
        $region68: #{layer_scale_init_block.3} parent=43 // pred_fallthru
          _
      $region44: #{layer_scale_init_block.3} parent=5 // pred_fallthru
        _
      %p656 = scmp.le.s32.totalorder 2, %s17
      // Predicated region
      $region69: #{layer_scale_init_block.3} parent=5 // pred_check
        %p657 = pneg %p656
      $region70: #{layer_scale_init_block.3} parent=5 // pred_check_branch
        %659 = sbr.rel (%p657) target = $region72
      $region71: #{layer_scale_init_block.3} parent=5 // pred_region
        %s660 = ssub.s32 %s17, 2
        // Predicated region
        $region73: #{layer_scale_init_block.3} parent=71 // pred_check
          %p661 = pneg %p193
        $region74: #{layer_scale_init_block.3} parent=71 // pred_check_branch
          %663 = sbr.rel (%p661) target = $region76
        $region75: #{layer_scale_init_block.3} parent=71 // pred_region
          %p664 = scmp.lt.s32.totalorder %s28, 1
          %s665 = scalar_select %p664, %s28, 1
          %p666 = scmp.lt.s32.totalorder %s29, 0
          %s667 = scalar_select %p666, %s29, 0
          %s668 = sadd.s32 %s667, %s665
          %s669 = smul.addr %s668, 4
          %s670 = scalar_lea.vmem %s6, %s669
        $region76: #{layer_scale_init_block.3} parent=71 // pred_fallthru
          _
        // Predicated region
        $region77: #{layer_scale_init_block.3} parent=71 // pred_check
          %p671 = pneg %p221
        $region78: #{layer_scale_init_block.3} parent=71 // pred_check_branch
          %673 = sbr.rel (%p671) target = $region80
        $region79: #{layer_scale_init_block.3} parent=71 // pred_region
          %p674 = scmp.lt.s32.totalorder %s28, 1
          %s675 = scalar_select %p674, %s28, 1
          %p676 = scmp.lt.s32.totalorder %s29, 0
          %s677 = scalar_select %p676, %s29, 0
          %s678 = sadd.s32 %s677, %s675
          %s679 = smul.addr %s678, 4
          %s680 = scalar_lea.vmem %s7, %s679
        $region80: #{layer_scale_init_block.3} parent=71 // pred_fallthru
          _
        // Predicated region
        $region81: #{layer_scale_init_block.3} parent=71 // pred_check
          %p681 = pneg %p249
        $region82: #{layer_scale_init_block.3} parent=71 // pred_check_branch
          %683 = sbr.rel (%p681) target = $region84
        $region83: #{layer_scale_init_block.3} parent=71 // pred_region
          %p684 = scmp.lt.s32.totalorder %s28, 1
          %s685 = scalar_select %p684, %s28, 1
          %p686 = scmp.lt.s32.totalorder %s29, 0
          %s687 = scalar_select %p686, %s29, 0
          %s688 = sadd.s32 %s687, %s685
          %s689 = smul.addr %s688, 4
          %s690 = scalar_lea.vmem %s8, %s689
        $region84: #{layer_scale_init_block.3} parent=71 // pred_fallthru
          _
      $region72: #{layer_scale_init_block.3} parent=5 // pred_fallthru
        _
    $region6: #{layer_scale_init_block.3} parent=1 // loop_footer
      %s21 = sadd.s32 1, %s17
    $region7: #{layer_scale_init_block.3} parent=1 // loop_footer_branch
      %16 = sbr.rel target = $region3
    $region8: #{layer_scale_init_block.3} parent=1 // loop_exit
      _
    %691 = vsyncpa [#allocation3], 1
    %s692 = scalar_lea.sflag [#allocation3], 1
    %693 = vsyncpa %s692, 1
    %694 = vsyncpa [#allocation5], 1

</llo_original>
